<compile_context>
chip_gen: v5e
topology: v5e:2x2
jax: 0.10.0
libtpu: 0.0.40
codegen_flags: <defaults>
</compile_context>

<pallas_src>
import functools

import jax
import jax.numpy as jnp
from jax import lax
from jax.experimental import pallas as pl
from jax.experimental.pallas import tpu as pltpu

EPS = 1e-5
LANE = 128                       # lane width; pad K / Cout to multiples of this
TM_MAX = 512                     # max rows per M tile (fits v7x 64 MiB VMEM too)
VMEM_LIMIT = 48 * 1024 * 1024    # below v7x's 64 MiB physical VMEM


def _round_up(x, m):
    return (x + m - 1) // m * m


def _choose_tm(M):
    """Rows per M tile: multiple of 8, <= TM_MAX, preferring a divisor of M (no
    padding / no inter-kernel slices) and >= 4 tiles (>= 2 minimum) so v7x's two
    TensorCores both get work and the pipeline has iterations to overlap."""
    if M <= 16:
        return _round_up(max(M, 8), 8)
    want = min(TM_MAX, _round_up((M + 3) // 4, 8))
    tm = (want // 8) * 8
    while tm >= 8:
        if M % tm == 0:
            return tm
        tm -= 8
    return want  # no multiple-of-8 divisor of M; M will be padded


def _pad2(a, rows, cols):
    r, c = a.shape
    if r == rows and c == cols:
        return a
    return jnp.pad(a, ((0, rows - r), (0, cols - c)))


# ----------------------------------------------------------------------------
# Kernel A: conv-as-matmul (bf16 MXU, f32 acc) + per-tile BN partial statistics
# ----------------------------------------------------------------------------
def _write_stats(stats_ref, y_f32):
    s = jnp.sum(y_f32, axis=0, keepdims=True)          # (1, C)
    ss = jnp.sum(y_f32 * y_f32, axis=0, keepdims=True)  # (1, C)
    stats_ref[...] = jnp.concatenate(
        [s, ss, jnp.zeros((6, y_f32.shape[1]), jnp.float32)], axis=0)


def _conv_stats_kernel(p_ref, w_ref, y_ref, stats_ref):
    y = jnp.dot(p_ref[...], w_ref[...], preferred_element_type=jnp.float32)
    y_ref[...] = y.astype(y_ref.dtype)                  # bf16 store
    _write_stats(stats_ref, y)                          # stats in f32


def _conv_stats_fused_kernel(p_ref, w_ref, id_ref, wds_ref,
                             y_ref, stats_ref, yds_ref, stats_ds_ref):
    y = jnp.dot(p_ref[...], w_ref[...], preferred_element_type=jnp.float32)
    y_ref[...] = y.astype(y_ref.dtype)
    _write_stats(stats_ref, y)
    # Fused 1x1 downsample conv of the strided identity: small dot that hides
    # under the big conv2 matmul, saves a second full-M pallas_call.
    yd = jnp.dot(id_ref[...], wds_ref[...], preferred_element_type=jnp.float32)
    yds_ref[...] = yd.astype(yds_ref.dtype)
    _write_stats(stats_ds_ref, yd)


def _conv_stats(patches_bf16, w_mat_f32, c_pad, extra=None):
    """patches [M, K] bf16, w [K, C] f32.

    Returns ([y_bf16 (M_pad, c_pad), stats_f32 (n_tiles*8, c_pad), (+ fused
    downsample outputs when extra=(ident_bf16, w_ds_f32))], geometry)."""
    M, K = patches_bf16.shape
    C = w_mat_f32.shape[1]
    K_pad = _round_up(K, LANE)
    TM = _choose_tm(M)
    M_pad = _round_up(M, TM)
    n_tiles = M_pad // TM

    p = _pad2(patches_bf16, M_pad, K_pad)
    w = _pad2(w_mat_f32, K_pad, c_pad).astype(jnp.bfloat16)

    tile_in = pl.BlockSpec((TM, K_pad), lambda i: (i, 0))
    w_spec = pl.BlockSpec((K_pad, c_pad), lambda i: (0, 0))      # resident weight
    y_spec = pl.BlockSpec((TM, c_pad), lambda i: (i, 0))
    st_spec = pl.BlockSpec((8, c_pad), lambda i: (i, 0))

    inputs = [p, w]
    in_specs = [tile_in, w_spec]
    out_shapes = [jax.ShapeDtypeStruct((M_pad, c_pad), jnp.bfloat16),
                  jax.ShapeDtypeStruct((n_tiles * 8, c_pad), jnp.float32)]
    out_specs = [y_spec, st_spec]
    kernel = _conv_stats_kernel

    if extra is not None:
        ident_bf16, wds_f32 = extra
        Ki = ident_bf16.shape[1]
        Ki_pad = _round_up(Ki, LANE)
        inputs += [_pad2(ident_bf16, M_pad, Ki_pad),
                   _pad2(wds_f32, Ki_pad, c_pad).astype(jnp.bfloat16)]
        in_specs += [pl.BlockSpec((TM, Ki_pad), lambda i: (i, 0)),
                     pl.BlockSpec((Ki_pad, c_pad), lambda i: (0, 0))]
        out_shapes += [jax.ShapeDtypeStruct((M_pad, c_pad), jnp.bfloat16),
                       jax.ShapeDtypeStruct((n_tiles * 8, c_pad), jnp.float32)]
        out_specs += [y_spec, st_spec]
        kernel = _conv_stats_fused_kernel

    outs = pl.pallas_call(
        kernel,
        out_shape=tuple(out_shapes),
        grid_spec=pltpu.PrefetchScalarGridSpec(
            num_scalar_prefetch=0,
            grid=(n_tiles,),
            in_specs=in_specs,
            out_specs=tuple(out_specs)),
        compiler_params=pltpu.CompilerParams(
            dimension_semantics=("parallel",),
            vmem_limit_bytes=VMEM_LIMIT),
    )(*inputs)

    geom = (M, M_pad, TM, n_tiles, C, c_pad)
    return list(outs), geom


def _bn_fold(stats, M, gamma, beta, c_pad):
    """Reduce per-tile partial stats and fold gamma/beta into scale/shift."""
    st = stats.reshape(-1, 8, c_pad)
    mean = jnp.sum(st[:, 0, :], axis=0) / M
    var = jnp.maximum(jnp.sum(st[:, 1, :], axis=0) / M - mean * mean, 0.0)
    C = gamma.shape[0]
    # gamma padded with ZEROS so padded channels get scale=0, shift=0 -> stay 0.
    g = jnp.pad(gamma.astype(jnp.float32), (0, c_pad - C))
    b = jnp.pad(beta.astype(jnp.float32), (0, c_pad - C))
    scale = g * lax.rsqrt(var + EPS)
    shift = b - mean * scale
    return (jnp.broadcast_to(scale[None, :], (8, c_pad)),
            jnp.broadcast_to(shift[None, :], (8, c_pad)))


# ----------------------------------------------------------------------------
# Kernel B: apply folded BN scale/shift [+ residual / fused downsample BN] [+ReLU]
# ----------------------------------------------------------------------------
def _make_bn_apply_kernel(mode, do_relu):
    def kernel(*refs):
        if mode == "bn":
            y_ref, sc_ref, sh_ref, yd_ref, scd_ref, shd_ref, o_ref = refs
        elif mode == "plain":
            y_ref, sc_ref, sh_ref, r_ref, o_ref = refs
        else:
            y_ref, sc_ref, sh_ref, o_ref = refs

        out = y_ref[...].astype(jnp.float32) * sc_ref[0:1, :] + sh_ref[0:1, :]
        if mode == "bn":          # fused downsample BN-apply on the identity
            out = out + (yd_ref[...].astype(jnp.float32) * scd_ref[0:1, :]
                         + shd_ref[0:1, :])
        elif mode == "plain":
            out = out + r_ref[...].astype(jnp.float32)
        if do_relu:
            out = jnp.maximum(out, 0.0)
        o_ref[...] = out.astype(o_ref.dtype)
    return kernel


def _bn_apply(y, scale8, shift8, geom, residual=None, residual_bn=None,
              do_relu=True, out_dtype=jnp.bfloat16):
    M, M_pad, TM, n_tiles, C, c_pad = geom
    tile = pl.BlockSpec((TM, c_pad), lambda i: (i, 0))
    vec = pl.BlockSpec((8, c_pad), lambda i: (0, 0))   # resident per-channel vecs

    inputs = [y, scale8, shift8]
    in_specs = [tile, vec, vec]
    if residual_bn is not None:
        yd, scd8, shd8 = residual_bn
        inputs += [yd, scd8, shd8]
        in_specs += [tile, vec, vec]
        mode = "bn"
    elif residual is not None:
        inputs.append(_pad2(residual, M_pad, c_pad))   # bf16 residual
        in_specs.append(tile)
        mode = "plain"
    else:
        mode = "none"

    return pl.pallas_call(
        _make_bn_apply_kernel(mode, do_relu),
        out_shape=jax.ShapeDtypeStruct((M_pad, c_pad), out_dtype),
        grid_spec=pltpu.PrefetchScalarGridSpec(
            num_scalar_prefetch=0,
            grid=(n_tiles,),
            in_specs=in_specs,
            out_specs=tile),
        compiler_params=pltpu.CompilerParams(
            dimension_semantics=("parallel",),
            vmem_limit_bytes=VMEM_LIMIT),
    )(*inputs)


# ----------------------------------------------------------------------------
# Glue: im2col patch extraction (NHWC, bf16), weight repacking
# ----------------------------------------------------------------------------
def _extract_patches_3x3(x_nhwc, stride):
    N, H, W, C = x_nhwc.shape
    xp = jnp.pad(x_nhwc, ((0, 0), (1, 1), (1, 1), (0, 0)))
    Ho = (H + 2 - 3) // stride + 1
    Wo = (W + 2 - 3) // stride + 1
    cols = []
    for kh in range(3):
        for kw in range(3):
            cols.append(xp[:,
                           kh:kh + (Ho - 1) * stride + 1:stride,
                           kw:kw + (Wo - 1) * stride + 1:stride, :])
    patches = jnp.concatenate(cols, axis=-1)           # [N, Ho, Wo, 9*C]
    return patches.reshape(N * Ho * Wo, 9 * C), (Ho, Wo)


def _repack_w3x3(w_oihw, in_pad=None):
    # (O, I, 3, 3) -> (3, 3, I, O) -> (9*I, O); I optionally zero-padded to match
    # a channel-padded activation (padded activation channels are exactly zero).
    O, I = w_oihw.shape[:2]
    w = w_oihw
    if in_pad is not None and in_pad > I:
        w = jnp.pad(w, ((0, 0), (0, in_pad - I), (0, 0), (0, 0)))
    return jnp.transpose(w, (2, 3, 1, 0)).reshape(9 * w.shape[1], O)


def _repack_w1x1(w_oihw):
    return jnp.transpose(w_oihw[:, :, 0, 0], (1, 0))   # (O, I, 1, 1) -> (I, O)


# ----------------------------------------------------------------------------
# BasicBlock forward (Pallas)
# ----------------------------------------------------------------------------
def basic_block_forward(x_nchw, params, stride):
    x = jnp.transpose(x_nchw, (0, 2, 3, 1))             # NHWC f32
    N, H, W, Cin = x.shape
    Cout = params["w1"].shape[0]
    c_pad = _round_up(Cout, LANE)
    x_bf = x.astype(jnp.bfloat16)                        # bf16 before im2col

    # --- conv1 -> bn1 -> relu -------------------------------------------------
    patches1, (Ho, Wo) = _extract_patches_3x3(x_bf, stride)
    M = N * Ho * Wo
    (y1, st1), geom1 = _conv_stats(patches1, _repack_w3x3(params["w1"]), c_pad)
    sc1, sh1 = _bn_fold(st1, M, params["g1"], params["b1"], c_pad)
    out1 = _bn_apply(y1, sc1, sh1, geom1, do_relu=True)  # bf16 [M_pad1, c_pad]
    if geom1[1] != M:                                    # only when TM doesn't divide M
        out1 = out1[:M]
    out1_nhwc = out1.reshape(N, Ho, Wo, c_pad)           # padded channels carried

    # --- conv2 (+ fused 1x1 downsample) -> bn2 -> (+identity) -> relu ----------
    patches2, _ = _extract_patches_3x3(out1_nhwc, 1)     # K = 9*c_pad (lane dense)
    w2 = _repack_w3x3(params["w2"], in_pad=c_pad)

    if "w_ds" in params:
        ident = x_bf[:, ::stride, ::stride, :].reshape(M, Cin)
        outs, geom2 = _conv_stats(patches2, w2, c_pad,
                                  extra=(ident, _repack_w1x1(params["w_ds"])))
        y2, st2, yds, stds = outs
        sc2, sh2 = _bn_fold(st2, M, params["g2"], params["b2"], c_pad)
        scd, shd = _bn_fold(stds, M, params["g_ds"], params["b_ds"], c_pad)
        out2 = _bn_apply(y2, sc2, sh2, geom2,
                         residual_bn=(yds, scd, shd), do_relu=True)
    else:
        assert stride == 1 and Cin == Cout, \
            "identity path requires stride == 1 and in_channels == out_channels"
        residual = x_bf.reshape(M, Cin)
        outs, geom2 = _conv_stats(patches2, w2, c_pad)
        y2, st2 = outs
        sc2, sh2 = _bn_fold(st2, M, params["g2"], params["b2"], c_pad)
        out2 = _bn_apply(y2, sc2, sh2, geom2, residual=residual, do_relu=True)

    # single slice / transpose / f32 cast at the module boundary
    out = out2[:M, :Cout].astype(jnp.float32).reshape(N, Ho, Wo, Cout)
    return jnp.transpose(out, (0, 3, 1, 2))              # back to NCHW


# ----------------------------------------------------------------------------
# Pure-JAX reference (PyTorch training-mode semantics)
# ----------------------------------------------------------------------------
def basic_block_ref(x_nchw, params, stride):
    def conv(x, w, s, pad):
        return lax.conv_general_dilated(
            x, w, (s, s), padding=[(pad, pad), (pad, pad)],
            dimension_numbers=("NCHW", "OIHW", "NCHW"))

    def bn(x, g, b):
        mean = x.mean(axis=(0, 2, 3), keepdims=True)
        var = ((x - mean) ** 2).mean(axis=(0, 2, 3), keepdims=True)
        return ((x - mean) * lax.rsqrt(var + EPS)
                * g.reshape(1, -1, 1, 1) + b.reshape(1, -1, 1, 1))

    identity = x_nchw
    if "w_ds" in params:
        identity = bn(conv(x_nchw, params["w_ds"], stride, 0),
                      params["g_ds"], params["b_ds"])
    out = jnp.maximum(bn(conv(x_nchw, params["w1"], stride, 1),
                         params["g1"], params["b1"]), 0.0)
    out = bn(conv(out, params["w2"], 1, 1), params["g2"], params["b2"]) + identity
    return jnp.maximum(out, 0.0)


# ----------------------------------------------------------------------------
def init_params(key, in_channels, out_channels, stride):
    k1, k2, k3 = jax.random.split(key, 3)
    params = {
        "w1": 0.1 * jax.random.normal(k1, (out_channels, in_channels, 3, 3), jnp.float32),
        "g1": jnp.ones((out_channels,), jnp.float32),
        "b1": jnp.zeros((out_channels,), jnp.float32),
        "w2": 0.1 * jax.random.normal(k2, (out_channels, out_channels, 3, 3), jnp.float32),
        "g2": jnp.ones((out_channels,), jnp.float32),
        "b2": jnp.zeros((out_channels,), jnp.float32),
    }
    if stride != 1 or in_channels != out_channels:
        params["w_ds"] = 0.1 * jax.random.normal(
            k3, (out_channels, in_channels, 1, 1), jnp.float32)
        params["g_ds"] = jnp.ones((out_channels,), jnp.float32)
        params["b_ds"] = jnp.zeros((out_channels,), jnp.float32)
    return params


def _run_case(key, N, Cin, Cout, H, W, stride):
    kx, kp = jax.random.split(key)
    x = jax.random.normal(kx, (N, Cin, H, W), jnp.float32)
    params = init_params(kp, Cin, Cout, stride)
    fwd = jax.jit(functools.partial(basic_block_forward, stride=stride))
    out = jax.block_until_ready(fwd(x, params))
    ref = basic_block_ref(x, params, stride)
    Ho = (H + 2 - 3) // stride + 1
    assert out.shape == ref.shape == (N, Cout, Ho, Ho)
    # bf16 MXU operands + bf16 intermediates -> looser tolerance than pure f32.
    assert jnp.allclose(out, ref, rtol=5e-2, atol=5e-2), \
        f"mismatch vs reference (stride={stride})"


if __name__ == "__main__":
    key = jax.random.PRNGKey(0)
    k1, k2 = jax.random.split(key)

    # Downsample branch: batch=2, in=4, out=8, spatial=16, stride=2
    # (exercises the fused 1x1-conv + downsample-BN residual path).
    _run_case(k1, N=2, Cin=4, Cout=8, H=16, W=16, stride=2)

    # Identity branch: batch=2, in=out=8, spatial=8, stride=1
    # (exercises the plain-residual path).
    _run_case(k2, N=2, Cin=8, Cout=8, H=8, W=8, stride=1)

    print("KERNEL_OK")
</pallas_src>

<mosaic_0001>
module attributes {stable_mosaic.version = 11 : i64} {
  func.func @_conv_stats_kernel(%arg0: i32, %arg1: memref<32x128xbf16, #tpu.memory_space<vmem>>, %arg2: memref<128x128xbf16, #tpu.memory_space<vmem>>, %arg3: memref<32x128xbf16, #tpu.memory_space<vmem>>, %arg4: memref<8x128xf32, #tpu.memory_space<vmem>>) attributes {dimension_semantics = [#tpu.dimension_semantics<parallel>], iteration_bounds = array<i64: 4>, scalar_prefetch = 0 : i64, scratch_operands = 0 : i64, tpu.core_type = #tpu.core_type<tc>, window_params = [{transform_indices = @transform_0, window_bounds = array<i64: 32, 128>}, {pipeline_mode = #tpu.pipeline_mode<synchronous>, transform_indices = @transform_1, window_bounds = array<i64: 128, 128>}, {transform_indices = @transform_2, window_bounds = array<i64: 32, 128>}, {transform_indices = @transform_3, window_bounds = array<i64: 8, 128>}]} {
    %c0 = arith.constant 0 : index
    %c0_0 = arith.constant 0 : index
    %0 = vector.load %arg1[%c0, %c0_0] : memref<32x128xbf16, #tpu.memory_space<vmem>>, vector<32x128xbf16>
    %c0_1 = arith.constant 0 : index
    %c0_2 = arith.constant 0 : index
    %1 = vector.load %arg2[%c0_1, %c0_2] : memref<128x128xbf16, #tpu.memory_space<vmem>>, vector<128x128xbf16>
    %cst = arith.constant dense<0.000000e+00> : vector<32x128xf32>
    %2 = tpu.matmul %0, %1, %cst {dimension_numbers = #tpu.dot_dimension_numbers<[1], [0], [0], [1], [0, 0, 1, 1], [], []>} : vector<32x128xbf16>, vector<128x128xbf16>, vector<32x128xf32> -> vector<32x128xf32>
    %3 = arith.truncf %2 : vector<32x128xf32> to vector<32x128xbf16>
    %c0_3 = arith.constant 0 : index
    %c0_4 = arith.constant 0 : index
    %4 = vector.load %arg3[%c0_3, %c0_4] : memref<32x128xbf16, #tpu.memory_space<vmem>>, vector<32x128xbf16>
    tpu.vector_store %arg3[%c0_3, %c0_4], %3 {strides = array<i32>} : memref<32x128xbf16, #tpu.memory_space<vmem>>, vector<32x128xbf16>,
    %cst_5 = arith.constant dense<0.000000e+00> : vector<128xf32>
    %5 = vector.multi_reduction <add>, %2, %cst_5 [0] : vector<32x128xf32> to vector<128xf32>
    %6 = vector.shape_cast %5 : vector<128xf32> to vector<1x128xf32>
    %7 = arith.mulf %2, %2 : vector<32x128xf32>
    %cst_6 = arith.constant dense<0.000000e+00> : vector<128xf32>
    %8 = vector.multi_reduction <add>, %7, %cst_6 [0] : vector<32x128xf32> to vector<128xf32>
    %9 = vector.shape_cast %8 : vector<128xf32> to vector<1x128xf32>
    %cst_7 = arith.constant 0.000000e+00 : f32
    %10 = vector.broadcast %cst_7 : f32 to vector<6x128xf32>
    %11 = tpu.concatenate %6, %9, %10 in 0 : vector<1x128xf32>, vector<1x128xf32>, vector<6x128xf32> -> vector<8x128xf32>
    %c0_8 = arith.constant 0 : index
    %c0_9 = arith.constant 0 : index
    %12 = vector.load %arg4[%c0_8, %c0_9] : memref<8x128xf32, #tpu.memory_space<vmem>>, vector<8x128xf32>
    tpu.vector_store %arg4[%c0_8, %c0_9], %11 {strides = array<i32>} : memref<8x128xf32, #tpu.memory_space<vmem>>, vector<8x128xf32>,
    return
  }
  func.func @transform_0(%arg0: i32) -> (i32, i32) {
    %c0_i32 = arith.constant 0 : i32
    %c0_i32_0 = arith.constant 0 : i32
    return %arg0, %c0_i32 : i32, i32
  }
  func.func @transform_1(%arg0: i32) -> (i32, i32) {
    %c0_i32 = arith.constant 0 : i32
    %c0_i32_0 = arith.constant 0 : i32
    %c0_i32_1 = arith.constant 0 : i32
    return %c0_i32, %c0_i32_0 : i32, i32
  }
  func.func @transform_2(%arg0: i32) -> (i32, i32) {
    %c0_i32 = arith.constant 0 : i32
    %c0_i32_0 = arith.constant 0 : i32
    return %arg0, %c0_i32 : i32, i32
  }
  func.func @transform_3(%arg0: i32) -> (i32, i32) {
    %c0_i32 = arith.constant 0 : i32
    %c0_i32_0 = arith.constant 0 : i32
    return %arg0, %c0_i32 : i32, i32
  }
}

module attributes {stable_mosaic.version = 11 : i64} {
  func.func @kernel(%arg0: i32, %arg1: memref<32x128xbf16, #tpu.memory_space<vmem>>, %arg2: memref<8x128xf32, #tpu.memory_space<vmem>>, %arg3: memref<8x128xf32, #tpu.memory_space<vmem>>, %arg4: memref<32x128xbf16, #tpu.memory_space<vmem>>) attributes {dimension_semantics = [#tpu.dimension_semantics<parallel>], iteration_bounds = array<i64: 4>, scalar_prefetch = 0 : i64, scratch_operands = 0 : i64, tpu.core_type = #tpu.core_type<tc>, window_params = [{transform_indices = @transform_0, window_bounds = array<i64: 32, 128>}, {pipeline_mode = #tpu.pipeline_mode<synchronous>, transform_indices = @transform_1, window_bounds = array<i64: 8, 128>}, {pipeline_mode = #tpu.pipeline_mode<synchronous>, transform_indices = @transform_2, window_bounds = array<i64: 8, 128>}, {transform_indices = @transform_3, window_bounds = array<i64: 32, 128>}]} {
    %c0 = arith.constant 0 : index
    %c0_0 = arith.constant 0 : index
    %0 = vector.load %arg1[%c0, %c0_0] : memref<32x128xbf16, #tpu.memory_space<vmem>>, vector<32x128xbf16>
    %1 = arith.extf %0 : vector<32x128xbf16> to vector<32x128xf32>
    %c0_1 = arith.constant 0 : index
    %c0_2 = arith.constant 0 : index
    %2 = vector.load %arg2[%c0_1, %c0_2] : memref<8x128xf32, #tpu.memory_space<vmem>>, vector<1x128xf32>
    %3 = vector.broadcast %2 : vector<1x128xf32> to vector<32x128xf32>
    %4 = arith.mulf %1, %3 : vector<32x128xf32>
    %c0_3 = arith.constant 0 : index
    %c0_4 = arith.constant 0 : index
    %5 = vector.load %arg3[%c0_3, %c0_4] : memref<8x128xf32, #tpu.memory_space<vmem>>, vector<1x128xf32>
    %6 = vector.broadcast %5 : vector<1x128xf32> to vector<32x128xf32>
    %7 = arith.addf %4, %6 : vector<32x128xf32>
    %cst = arith.constant 0.000000e+00 : f32
    %8 = vector.broadcast %cst : f32 to vector<32x128xf32>
    %9 = arith.maximumf %7, %8 : vector<32x128xf32>
    %10 = arith.truncf %9 : vector<32x128xf32> to vector<32x128xbf16>
    %c0_5 = arith.constant 0 : index
    %c0_6 = arith.constant 0 : index
    %11 = vector.load %arg4[%c0_5, %c0_6] : memref<32x128xbf16, #tpu.memory_space<vmem>>, vector<32x128xbf16>
    tpu.vector_store %arg4[%c0_5, %c0_6], %10 {strides = array<i32>} : memref<32x128xbf16, #tpu.memory_space<vmem>>, vector<32x128xbf16>,
    return
  }
  func.func @transform_0(%arg0: i32) -> (i32, i32) {
    %c0_i32 = arith.constant 0 : i32
    %c0_i32_0 = arith.constant 0 : i32
    return %arg0, %c0_i32 : i32, i32
  }
  func.func @transform_1(%arg0: i32) -> (i32, i32) {
    %c0_i32 = arith.constant 0 : i32
    %c0_i32_0 = arith.constant 0 : i32
    %c0_i32_1 = arith.constant 0 : i32
    return %c0_i32, %c0_i32_0 : i32, i32
  }
  func.func @transform_2(%arg0: i32) -> (i32, i32) {
    %c0_i32 = arith.constant 0 : i32
    %c0_i32_0 = arith.constant 0 : i32
    %c0_i32_1 = arith.constant 0 : i32
    return %c0_i32, %c0_i32_0 : i32, i32
  }
  func.func @transform_3(%arg0: i32) -> (i32, i32) {
    %c0_i32 = arith.constant 0 : i32
    %c0_i32_0 = arith.constant 0 : i32
    return %arg0, %c0_i32 : i32, i32
  }
}

module attributes {stable_mosaic.version = 11 : i64} {
  func.func @kernel(%arg0: i32, %arg1: memref<32x128xbf16, #tpu.memory_space<vmem>>, %arg2: memref<8x128xf32, #tpu.memory_space<vmem>>, %arg3: memref<8x128xf32, #tpu.memory_space<vmem>>, %arg4: memref<32x128xbf16, #tpu.memory_space<vmem>>, %arg5: memref<8x128xf32, #tpu.memory_space<vmem>>, %arg6: memref<8x128xf32, #tpu.memory_space<vmem>>, %arg7: memref<32x128xbf16, #tpu.memory_space<vmem>>) attributes {dimension_semantics = [#tpu.dimension_semantics<parallel>], iteration_bounds = array<i64: 4>, scalar_prefetch = 0 : i64, scratch_operands = 0 : i64, tpu.core_type = #tpu.core_type<tc>, window_params = [{transform_indices = @transform_0, window_bounds = array<i64: 32, 128>}, {pipeline_mode = #tpu.pipeline_mode<synchronous>, transform_indices = @transform_1, window_bounds = array<i64: 8, 128>}, {pipeline_mode = #tpu.pipeline_mode<synchronous>, transform_indices = @transform_2, window_bounds = array<i64: 8, 128>}, {transform_indices = @transform_3, window_bounds = array<i64: 32, 128>}, {pipeline_mode = #tpu.pipeline_mode<synchronous>, transform_indices = @transform_4, window_bounds = array<i64: 8, 128>}, {pipeline_mode = #tpu.pipeline_mode<synchronous>, transform_indices = @transform_5, window_bounds = array<i64: 8, 128>}, {transform_indices = @transform_6, window_bounds = array<i64: 32, 128>}]} {
    %c0 = arith.constant 0 : index
    %c0_0 = arith.constant 0 : index
    %0 = vector.load %arg1[%c0, %c0_0] : memref<32x128xbf16, #tpu.memory_space<vmem>>, vector<32x128xbf16>
    %1 = arith.extf %0 : vector<32x128xbf16> to vector<32x128xf32>
    %c0_1 = arith.constant 0 : index
    %c0_2 = arith.constant 0 : index
    %2 = vector.load %arg2[%c0_1, %c0_2] : memref<8x128xf32, #tpu.memory_space<vmem>>, vector<1x128xf32>
    %3 = vector.broadcast %2 : vector<1x128xf32> to vector<32x128xf32>
    %4 = arith.mulf %1, %3 : vector<32x128xf32>
    %c0_3 = arith.constant 0 : index
    %c0_4 = arith.constant 0 : index
    %5 = vector.load %arg3[%c0_3, %c0_4] : memref<8x128xf32, #tpu.memory_space<vmem>>, vector<1x128xf32>
    %6 = vector.broadcast %5 : vector<1x128xf32> to vector<32x128xf32>
    %7 = arith.addf %4, %6 : vector<32x128xf32>
    %c0_5 = arith.constant 0 : index
    %c0_6 = arith.constant 0 : index
    %8 = vector.load %arg4[%c0_5, %c0_6] : memref<32x128xbf16, #tpu.memory_space<vmem>>, vector<32x128xbf16>
    %9 = arith.extf %8 : vector<32x128xbf16> to vector<32x128xf32>
    %c0_7 = arith.constant 0 : index
    %c0_8 = arith.constant 0 : index
    %10 = vector.load %arg5[%c0_7, %c0_8] : memref<8x128xf32, #tpu.memory_space<vmem>>, vector<1x128xf32>
    %11 = vector.broadcast %10 : vector<1x128xf32> to vector<32x128xf32>
    %12 = arith.mulf %9, %11 : vector<32x128xf32>
    %c0_9 = arith.constant 0 : index
    %c0_10 = arith.constant 0 : index
    %13 = vector.load %arg6[%c0_9, %c0_10] : memref<8x128xf32, #tpu.memory_space<vmem>>, vector<1x128xf32>
    %14 = vector.broadcast %13 : vector<1x128xf32> to vector<32x128xf32>
    %15 = arith.addf %12, %14 : vector<32x128xf32>
    %16 = arith.addf %7, %15 : vector<32x128xf32>
    %cst = arith.constant 0.000000e+00 : f32
    %17 = vector.broadcast %cst : f32 to vector<32x128xf32>
    %18 = arith.maximumf %16, %17 : vector<32x128xf32>
    %19 = arith.truncf %18 : vector<32x128xf32> to vector<32x128xbf16>
    %c0_11 = arith.constant 0 : index
    %c0_12 = arith.constant 0 : index
    %20 = vector.load %arg7[%c0_11, %c0_12] : memref<32x128xbf16, #tpu.memory_space<vmem>>, vector<32x128xbf16>
    tpu.vector_store %arg7[%c0_11, %c0_12], %19 {strides = array<i32>} : memref<32x128xbf16, #tpu.memory_space<vmem>>, vector<32x128xbf16>,
    return
  }
  func.func @transform_0(%arg0: i32) -> (i32, i32) {
    %c0_i32 = arith.constant 0 : i32
    %c0_i32_0 = arith.constant 0 : i32
    return %arg0, %c0_i32 : i32, i32
  }
  func.func @transform_1(%arg0: i32) -> (i32, i32) {
    %c0_i32 = arith.constant 0 : i32
    %c0_i32_0 = arith.constant 0 : i32
    %c0_i32_1 = arith.constant 0 : i32
    return %c0_i32, %c0_i32_0 : i32, i32
  }
  func.func @transform_2(%arg0: i32) -> (i32, i32) {
    %c0_i32 = arith.constant 0 : i32
    %c0_i32_0 = arith.constant 0 : i32
    %c0_i32_1 = arith.constant 0 : i32
    return %c0_i32, %c0_i32_0 : i32, i32
  }
  func.func @transform_3(%arg0: i32) -> (i32, i32) {
    %c0_i32 = arith.constant 0 : i32
    %c0_i32_0 = arith.constant 0 : i32
    return %arg0, %c0_i32 : i32, i32
  }
  func.func @transform_4(%arg0: i32) -> (i32, i32) {
    %c0_i32 = arith.constant 0 : i32
    %c0_i32_0 = arith.constant 0 : i32
    %c0_i32_1 = arith.constant 0 : i32
    return %c0_i32, %c0_i32_0 : i32, i32
  }
  func.func @transform_5(%arg0: i32) -> (i32, i32) {
    %c0_i32 = arith.constant 0 : i32
    %c0_i32_0 = arith.constant 0 : i32
    %c0_i32_1 = arith.constant 0 : i32
    return %c0_i32, %c0_i32_0 : i32, i32
  }
  func.func @transform_6(%arg0: i32) -> (i32, i32) {
    %c0_i32 = arith.constant 0 : i32
    %c0_i32_0 = arith.constant 0 : i32
    return %arg0, %c0_i32 : i32, i32
  }
}

module attributes {stable_mosaic.version = 11 : i64} {
  func.func @_conv_stats_fused_kernel(%arg0: i32, %arg1: memref<32x1152xbf16, #tpu.memory_space<vmem>>, %arg2: memref<1152x128xbf16, #tpu.memory_space<vmem>>, %arg3: memref<32x128xbf16, #tpu.memory_space<vmem>>, %arg4: memref<128x128xbf16, #tpu.memory_space<vmem>>, %arg5: memref<32x128xbf16, #tpu.memory_space<vmem>>, %arg6: memref<8x128xf32, #tpu.memory_space<vmem>>, %arg7: memref<32x128xbf16, #tpu.memory_space<vmem>>, %arg8: memref<8x128xf32, #tpu.memory_space<vmem>>) attributes {dimension_semantics = [#tpu.dimension_semantics<parallel>], iteration_bounds = array<i64: 4>, scalar_prefetch = 0 : i64, scratch_operands = 0 : i64, tpu.core_type = #tpu.core_type<tc>, window_params = [{transform_indices = @transform_0, window_bounds = array<i64: 32, 1152>}, {pipeline_mode = #tpu.pipeline_mode<synchronous>, transform_indices = @transform_1, window_bounds = array<i64: 1152, 128>}, {transform_indices = @transform_2, window_bounds = array<i64: 32, 128>}, {pipeline_mode = #tpu.pipeline_mode<synchronous>, transform_indices = @transform_3, window_bounds = array<i64: 128, 128>}, {transform_indices = @transform_4, window_bounds = array<i64: 32, 128>}, {transform_indices = @transform_5, window_bounds = array<i64: 8, 128>}, {transform_indices = @transform_6, window_bounds = array<i64: 32, 128>}, {transform_indices = @transform_7, window_bounds = array<i64: 8, 128>}]} {
    %c0 = arith.constant 0 : index
    %c0_0 = arith.constant 0 : index
    %0 = vector.load %arg1[%c0, %c0_0] : memref<32x1152xbf16, #tpu.memory_space<vmem>>, vector<32x1152xbf16>
    %c0_1 = arith.constant 0 : index
    %c0_2 = arith.constant 0 : index
    %1 = vector.load %arg2[%c0_1, %c0_2] : memref<1152x128xbf16, #tpu.memory_space<vmem>>, vector<1152x128xbf16>
    %cst = arith.constant dense<0.000000e+00> : vector<32x128xf32>
    %2 = tpu.matmul %0, %1, %cst {dimension_numbers = #tpu.dot_dimension_numbers<[1], [0], [0], [1], [0, 0, 1, 1], [], []>} : vector<32x1152xbf16>, vector<1152x128xbf16>, vector<32x128xf32> -> vector<32x128xf32>
    %3 = arith.truncf %2 : vector<32x128xf32> to vector<32x128xbf16>
    %c0_3 = arith.constant 0 : index
    %c0_4 = arith.constant 0 : index
    %4 = vector.load %arg5[%c0_3, %c0_4] : memref<32x128xbf16, #tpu.memory_space<vmem>>, vector<32x128xbf16>
    tpu.vector_store %arg5[%c0_3, %c0_4], %3 {strides = array<i32>} : memref<32x128xbf16, #tpu.memory_space<vmem>>, vector<32x128xbf16>,
    %cst_5 = arith.constant dense<0.000000e+00> : vector<128xf32>
    %5 = vector.multi_reduction <add>, %2, %cst_5 [0] : vector<32x128xf32> to vector<128xf32>
    %6 = vector.shape_cast %5 : vector<128xf32> to vector<1x128xf32>
    %7 = arith.mulf %2, %2 : vector<32x128xf32>
    %cst_6 = arith.constant dense<0.000000e+00> : vector<128xf32>
    %8 = vector.multi_reduction <add>, %7, %cst_6 [0] : vector<32x128xf32> to vector<128xf32>
    %9 = vector.shape_cast %8 : vector<128xf32> to vector<1x128xf32>
    %cst_7 = arith.constant 0.000000e+00 : f32
    %10 = vector.broadcast %cst_7 : f32 to vector<6x128xf32>
    %11 = tpu.concatenate %6, %9, %10 in 0 : vector<1x128xf32>, vector<1x128xf32>, vector<6x128xf32> -> vector<8x128xf32>
    %c0_8 = arith.constant 0 : index
    %c0_9 = arith.constant 0 : index
    %12 = vector.load %arg6[%c0_8, %c0_9] : memref<8x128xf32, #tpu.memory_space<vmem>>, vector<8x128xf32>
    tpu.vector_store %arg6[%c0_8, %c0_9], %11 {strides = array<i32>} : memref<8x128xf32, #tpu.memory_space<vmem>>, vector<8x128xf32>,
    %c0_10 = arith.constant 0 : index
    %c0_11 = arith.constant 0 : index
    %13 = vector.load %arg3[%c0_10, %c0_11] : memref<32x128xbf16, #tpu.memory_space<vmem>>, vector<32x128xbf16>
    %c0_12 = arith.constant 0 : index
    %c0_13 = arith.constant 0 : index
    %14 = vector.load %arg4[%c0_12, %c0_13] : memref<128x128xbf16, #tpu.memory_space<vmem>>, vector<128x128xbf16>
    %cst_14 = arith.constant dense<0.000000e+00> : vector<32x128xf32>
    %15 = tpu.matmul %13, %14, %cst_14 {dimension_numbers = #tpu.dot_dimension_numbers<[1], [0], [0], [1], [0, 0, 1, 1], [], []>} : vector<32x128xbf16>, vector<128x128xbf16>, vector<32x128xf32> -> vector<32x128xf32>
    %16 = arith.truncf %15 : vector<32x128xf32> to vector<32x128xbf16>
    %c0_15 = arith.constant 0 : index
    %c0_16 = arith.constant 0 : index
    %17 = vector.load %arg7[%c0_15, %c0_16] : memref<32x128xbf16, #tpu.memory_space<vmem>>, vector<32x128xbf16>
    tpu.vector_store %arg7[%c0_15, %c0_16], %16 {strides = array<i32>} : memref<32x128xbf16, #tpu.memory_space<vmem>>, vector<32x128xbf16>,
    %cst_17 = arith.constant dense<0.000000e+00> : vector<128xf32>
    %18 = vector.multi_reduction <add>, %15, %cst_17 [0] : vector<32x128xf32> to vector<128xf32>
    %19 = vector.shape_cast %18 : vector<128xf32> to vector<1x128xf32>
    %20 = arith.mulf %15, %15 : vector<32x128xf32>
    %cst_18 = arith.constant dense<0.000000e+00> : vector<128xf32>
    %21 = vector.multi_reduction <add>, %20, %cst_18 [0] : vector<32x128xf32> to vector<128xf32>
    %22 = vector.shape_cast %21 : vector<128xf32> to vector<1x128xf32>
    %cst_19 = arith.constant 0.000000e+00 : f32
    %23 = vector.broadcast %cst_19 : f32 to vector<6x128xf32>
    %24 = tpu.concatenate %19, %22, %23 in 0 : vector<1x128xf32>, vector<1x128xf32>, vector<6x128xf32> -> vector<8x128xf32>
    %c0_20 = arith.constant 0 : index
    %c0_21 = arith.constant 0 : index
    %25 = vector.load %arg8[%c0_20, %c0_21] : memref<8x128xf32, #tpu.memory_space<vmem>>, vector<8x128xf32>
    tpu.vector_store %arg8[%c0_20, %c0_21], %24 {strides = array<i32>} : memref<8x128xf32, #tpu.memory_space<vmem>>, vector<8x128xf32>,
    return
  }
  func.func @transform_0(%arg0: i32) -> (i32, i32) {
    %c0_i32 = arith.constant 0 : i32
    %c0_i32_0 = arith.constant 0 : i32
    return %arg0, %c0_i32 : i32, i32
  }
  func.func @transform_1(%arg0: i32) -> (i32, i32) {
    %c0_i32 = arith.constant 0 : i32
    %c0_i32_0 = arith.constant 0 : i32
    %c0_i32_1 = arith.constant 0 : i32
    return %c0_i32, %c0_i32_0 : i32, i32
  }
  func.func @transform_2(%arg0: i32) -> (i32, i32) {
    %c0_i32 = arith.constant 0 : i32
    %c0_i32_0 = arith.constant 0 : i32
    return %arg0, %c0_i32 : i32, i32
  }
  func.func @transform_3(%arg0: i32) -> (i32, i32) {
    %c0_i32 = arith.constant 0 : i32
    %c0_i32_0 = arith.constant 0 : i32
    %c0_i32_1 = arith.constant 0 : i32
    return %c0_i32, %c0_i32_0 : i32, i32
  }
  func.func @transform_4(%arg0: i32) -> (i32, i32) {
    %c0_i32 = arith.constant 0 : i32
    %c0_i32_0 = arith.constant 0 : i32
    return %arg0, %c0_i32 : i32, i32
  }
  func.func @transform_5(%arg0: i32) -> (i32, i32) {
    %c0_i32 = arith.constant 0 : i32
    %c0_i32_0 = arith.constant 0 : i32
    return %arg0, %c0_i32 : i32, i32
  }
  func.func @transform_6(%arg0: i32) -> (i32, i32) {
    %c0_i32 = arith.constant 0 : i32
    %c0_i32_0 = arith.constant 0 : i32
    return %arg0, %c0_i32 : i32, i32
  }
  func.func @transform_7(%arg0: i32) -> (i32, i32) {
    %c0_i32 = arith.constant 0 : i32
    %c0_i32_0 = arith.constant 0 : i32
    return %arg0, %c0_i32 : i32, i32
  }
}

</mosaic_0001>

<llo_original>
// kernel: basic_block_forward.5
$region0: #{basic_block_forward.5}
  #allocation0 [shape = 'u32[]', space=smem, size = 0x4, offset = 0x4, fixed_abs, tag = 'smem constant byte address 0x4 - core index']
  #allocation1 [shape = 'u32[72,128]{1,0:T(1,128)}', space=vmem, size = 0x9000, scoped, tag = 'internal scratch']
  %s0 = inlined_call_operand.vmem [shape: bf16[128,128], index: 0, kind: input, shape index: {}]
  %s1 = inlined_call_operand.vmem [shape: f32[8,128], index: 1, kind: input, shape index: {}]
  %s2 = inlined_call_operand.vmem [shape: f32[8,128], index: 2, kind: input, shape index: {}]
  %s3 = inlined_call_operand.vmem [shape: bf16[128,128], index: 3, kind: output, shape index: {}]
  %s4 = sld [smem:[#allocation0]]
  $region45: #{basic_block_forward.5} parent=0
    _
  %s6 = ssub.s32 1, %s4
  %s7 = scalar_select 0, %s6, %s4
  loop: start=0, step=1, limit=6
  $region2: #{basic_block_forward.5} parent=0 // loop_pre_header
    _
  $region3: #{basic_block_forward.5} parent=0 // loop_header
    %s9 = sphi 0, %s13
    %p10 = scmp.ge.s32.totalorder %s9, 6
    %s19 = sphi 0, %s21
    %s22 = sphi 0, %s19
    %s23 = sphi 0, %s22
    %s39 = sphi 0, %s23
    %s43 = sphi 0, %s43
    %s45 = sphi 0, %s43
    %s46 = sphi 0, %s45
    %s60 = sphi 0, %s46
    %s64 = sphi 0, %s64
    %s66 = sphi 0, %s64
    %s67 = sphi 0, %s66
    %s81 = sphi 0, %s67
    %s87 = sphi 0, %s89
    %s90 = sphi 0, %s87
    %s91 = sphi 0, %s90
    %s107 = sphi 0, %s91
  $region4: #{basic_block_forward.5} parent=0 // loop_header_branch
    %12 = sbr.rel (%p10) target = $region8
  $region5: #{basic_block_forward.5} parent=0 // loop_body
    %s14 = ssub.s32 %s9, 1
    %s15 = ssub.s32 %s9, 2
    %s16 = sadd.s32 %s9, 1
    %s17 = ssub.s32 %s9, %s16
    %p18 = scmp.eq.s32.totalorder %s17, 0
    %s20 = sadd.s32 %s19, 1
    %s21 = scalar_select %p18, %s19, %s20
    %p24 = pneg %p18
    %p25 = scmp.eq.s32.totalorder %s9, 3
    %p26 = por %p24, %p25
    %p27 = scmp.ne.s32.totalorder %s19, %s22
    %p28 = scmp.eq.s32.totalorder %s9, 0
    %p29 = por %p27, %p28
    %p30 = scmp.ne.s32.totalorder %s19, %s22
    %p31 = scmp.eq.s32.totalorder %s14, 3
    %p32 = por %p30, %p31
    %p33 = scmp.ne.s32.totalorder %s22, %s23
    %p34 = scmp.eq.s32.totalorder %s14, 0
    %p35 = por %p33, %p34
    %p36 = scmp.ne.s32.totalorder %s22, %s23
    %p37 = scmp.eq.s32.totalorder %s15, 3
    %p38 = por %p36, %p37
    %p40 = scmp.ne.s32.totalorder %s23, %s39
    %p41 = scmp.eq.s32.totalorder %s15, 0
    %p42 = por %p40, %p41
    %s44 = sadd.s32 %s43, 1
    %p47 = scmp.eq.s32.totalorder %s9, 3
    %p48 = scmp.ne.s32.totalorder %s43, %s45
    %p49 = scmp.eq.s32.totalorder %s9, 0
    %p50 = por %p48, %p49
    %p51 = scmp.ne.s32.totalorder %s43, %s45
    %p52 = scmp.eq.s32.totalorder %s14, 3
    %p53 = por %p51, %p52
    %p54 = scmp.ne.s32.totalorder %s45, %s46
    %p55 = scmp.eq.s32.totalorder %s14, 0
    %p56 = por %p54, %p55
    %p57 = scmp.ne.s32.totalorder %s45, %s46
    %p58 = scmp.eq.s32.totalorder %s15, 3
    %p59 = por %p57, %p58
    %p61 = scmp.ne.s32.totalorder %s46, %s60
    %p62 = scmp.eq.s32.totalorder %s15, 0
    %p63 = por %p61, %p62
    %s65 = sadd.s32 %s64, 1
    %p68 = scmp.eq.s32.totalorder %s9, 3
    %p69 = scmp.ne.s32.totalorder %s64, %s66
    %p70 = scmp.eq.s32.totalorder %s9, 0
    %p71 = por %p69, %p70
    %p72 = scmp.ne.s32.totalorder %s64, %s66
    %p73 = scmp.eq.s32.totalorder %s14, 3
    %p74 = por %p72, %p73
    %p75 = scmp.ne.s32.totalorder %s66, %s67
    %p76 = scmp.eq.s32.totalorder %s14, 0
    %p77 = por %p75, %p76
    %p78 = scmp.ne.s32.totalorder %s66, %s67
    %p79 = scmp.eq.s32.totalorder %s15, 3
    %p80 = por %p78, %p79
    %p82 = scmp.ne.s32.totalorder %s67, %s81
    %p83 = scmp.eq.s32.totalorder %s15, 0
    %p84 = por %p82, %p83
    %s85 = ssub.s32 %s9, %s16
    %p86 = scmp.eq.s32.totalorder %s85, 0
    %s88 = sadd.s32 %s87, 1
    %s89 = scalar_select %p86, %s87, %s88
    %p92 = pneg %p86
    %p93 = scmp.eq.s32.totalorder %s9, 3
    %p94 = por %p92, %p93
    %p95 = scmp.ne.s32.totalorder %s87, %s90
    %p96 = scmp.eq.s32.totalorder %s9, 0
    %p97 = por %p95, %p96
    %p98 = scmp.ne.s32.totalorder %s87, %s90
    %p99 = scmp.eq.s32.totalorder %s14, 3
    %p100 = por %p98, %p99
    %p101 = scmp.ne.s32.totalorder %s90, %s91
    %p102 = scmp.eq.s32.totalorder %s14, 0
    %p103 = por %p101, %p102
    %p104 = scmp.ne.s32.totalorder %s90, %s91
    %p105 = scmp.eq.s32.totalorder %s15, 3
    %p106 = por %p104, %p105
    %p108 = scmp.ne.s32.totalorder %s91, %s107
    %p109 = scmp.eq.s32.totalorder %s15, 0
    %p110 = por %p108, %p109
    %p111 = scmp.le.s32.totalorder 1, %s9
    %p112 = scmp.lt.s32.totalorder %s9, 5
    %p113 = pnand %p111, %p112
    %p114 = pneg %p113
    // Predicated region
    $region9: #{basic_block_forward.5} parent=5 // pred_check
      _
    $region10: #{basic_block_forward.5} parent=5 // pred_check_branch
      %116 = sbr.rel (%p113) target = $region12
    $region11: #{basic_block_forward.5} parent=5 // pred_region
      %s117 = ssub.s32 %s9, 1
      // Predicated region
      $region13: #{basic_block_forward.5} parent=11 // pred_check
        %p118 = pneg %p56
      $region14: #{basic_block_forward.5} parent=11 // pred_check_branch
        %120 = sbr.rel (%p118) target = $region16
      $region15: #{basic_block_forward.5} parent=11 // pred_region
        _
      $region16: #{basic_block_forward.5} parent=11 // pred_fallthru
        _
      // Predicated region
      $region17: #{basic_block_forward.5} parent=11 // pred_check
        %p121 = pneg %p77
      $region18: #{basic_block_forward.5} parent=11 // pred_check_branch
        %123 = sbr.rel (%p121) target = $region20
      $region19: #{basic_block_forward.5} parent=11 // pred_region
        _
      $region20: #{basic_block_forward.5} parent=11 // pred_fallthru
        _
    $region12: #{basic_block_forward.5} parent=5 // pred_fallthru
      _
    %p124 = scmp.lt.s32.totalorder %s9, 4
    // Predicated region
    $region21: #{basic_block_forward.5} parent=5 // pred_check
      %p125 = pneg %p124
    $region22: #{basic_block_forward.5} parent=5 // pred_check_branch
      %127 = sbr.rel (%p125) target = $region24
    $region23: #{basic_block_forward.5} parent=5 // pred_region
      // Predicated region
      $region25: #{basic_block_forward.5} parent=23 // pred_check
        %p128 = pneg %p29
      $region26: #{basic_block_forward.5} parent=23 // pred_check_branch
        %130 = sbr.rel (%p128) target = $region28
      $region27: #{basic_block_forward.5} parent=23 // pred_region
        %s131 = smul.u32 4, %s9
        %p132 = scmp.lt.s32.totalorder %s131, 15
        %s133 = scalar_select %p132, %s131, 15
        %s134 = smul.addr %s133, 4
        %s135 = scalar_lea.vmem %s0, %s134
        %s136 = smul.u32 4, %s9
      $region28: #{basic_block_forward.5} parent=23 // pred_fallthru
        _
    $region24: #{basic_block_forward.5} parent=5 // pred_fallthru
      _
    %p137 = scmp.le.s32.totalorder 1, %s9
    %p138 = scmp.lt.s32.totalorder %s9, 5
    %p139 = pnand %p137, %p138
    %p140 = pneg %p139
    // Predicated region
    $region29: #{basic_block_forward.5} parent=5 // pred_check
      _
    $region30: #{basic_block_forward.5} parent=5 // pred_check_branch
      %142 = sbr.rel (%p139) target = $region32
    $region31: #{basic_block_forward.5} parent=5 // pred_region
      %s143 = ssub.s32 %s9, 1
      %s144 = smul.u32 4, %s14
      %p145 = scmp.lt.s32.totalorder %s144, 15
      %s146 = scalar_select %p145, %s144, 15
      %s147 = smul.addr %s146, 4
      %s148 = scalar_lea.vmem %s0, %s147
      %p149 = pneg %p35
      %p150 = pneg %p32
      %p151 = pneg %p56
      %p152 = pneg %p53
      %p153 = pneg %p77
      %p154 = pneg %p74
      %p155 = pneg %p103
      %p156 = pneg %p100
      %s157 = smul.u32 4, %s14
      %p158 = scmp.lt.s32.totalorder %s157, 15
      %s159 = scalar_select %p158, %s157, 15
      %s160 = smul.addr %s159, 4
      %s161 = scalar_lea.vmem %s3, %s160
      %s162 = smul.u32 4, %s14
      %p163 = scmp.lt.s32.totalorder %s162, 15
      %s164 = scalar_select %p163, %s162, 15
      %s165 = smul.addr %s164, 4
      %s166 = scalar_lea.vmem %s0, %s165
      %s167 = smul.u32 4, %s14
      %s168 = smul.u32 4, %s14
      %p169 = scmp.lt.s32.totalorder %s168, 15
      %s170 = scalar_select %p169, %s168, 15
      %s171 = smul.addr %s170, 4
      %s172 = scalar_lea.vmem %s3, %s171
      %s173 = smul.u32 4, %s14
      %v174 = vld [vmem:[%s166] sm:$0xf]
      %v175 = vld [vmem:[%s166 + $0x4] sm:$0xf]
      %v176 = vld [vmem:[%s166 + $0x8] sm:$0xf]
      %v177 = vld [vmem:[%s166 + $0xc] sm:$0xf]
      %v178 = vunpack.c.l.bf16 %v174
      %v179 = vunpack.c.l.bf16 %v175
      %v180 = vunpack.c.l.bf16 %v176
      %v181 = vunpack.c.l.bf16 %v177
      %v182 = vld [vmem:[%s1] sm:$0x1]
      %v183 = vperm.slane %v182, 0
      %v184 = vmul.f32 %v178, %v183
      %v185 = vmul.f32 %v179, %v183
      %v186 = vmul.f32 %v180, %v183
      %v187 = vmul.f32 %v181, %v183
      %v188 = vld [vmem:[%s2] sm:$0x1]
      %v189 = vperm.slane %v188, 0
      %v190 = vadd.f32 %v184, %v189
      %v191 = vadd.f32 %v185, %v189
      %v192 = vadd.f32 %v186, %v189
      %v193 = vadd.f32 %v187, %v189
      %v194 = vmax.f32 %v190, 0.0
      %v195 = vmax.f32 %v191, 0.0
      %v196 = vmax.f32 %v192, 0.0
      %v197 = vmax.f32 %v193, 0.0
      %v198 = vpack.c.bf16 %v194, %v194
      %v199 = vpack.c.bf16 %v195, %v195
      %v200 = vpack.c.bf16 %v196, %v196
      %v201 = vpack.c.bf16 %v197, %v197
      %202 = vst [vmem:[%s172] sm:$0xf] %v198
      %203 = vst [vmem:[%s172 + $0x4] sm:$0xf] %v199
      %204 = vst [vmem:[%s172 + $0x8] sm:$0xf] %v200
      %205 = vst [vmem:[%s172 + $0xc] sm:$0xf] %v201
      %s206 = smul.u32 4, %s14
      %p207 = scmp.lt.s32.totalorder %s206, 15
      %s208 = scalar_select %p207, %s206, 15
      %s209 = smul.addr %s208, 4
      %s210 = scalar_lea.vmem %s3, %s209
      // Predicated region
      $region33: #{basic_block_forward.5} parent=31 // pred_check
        %p211 = pneg %p100
      $region34: #{basic_block_forward.5} parent=31 // pred_check_branch
        %213 = sbr.rel (%p211) target = $region36
      $region35: #{basic_block_forward.5} parent=31 // pred_region
        %s214 = smul.u32 4, %s14
      $region36: #{basic_block_forward.5} parent=31 // pred_fallthru
        _
    $region32: #{basic_block_forward.5} parent=5 // pred_fallthru
      _
    %p215 = scmp.le.s32.totalorder 2, %s9
    // Predicated region
    $region37: #{basic_block_forward.5} parent=5 // pred_check
      %p216 = pneg %p215
    $region38: #{basic_block_forward.5} parent=5 // pred_check_branch
      %218 = sbr.rel (%p216) target = $region40
    $region39: #{basic_block_forward.5} parent=5 // pred_region
      %s219 = ssub.s32 %s9, 2
      // Predicated region
      $region41: #{basic_block_forward.5} parent=39 // pred_check
        %p220 = pneg %p106
      $region42: #{basic_block_forward.5} parent=39 // pred_check_branch
        %222 = sbr.rel (%p220) target = $region44
      $region43: #{basic_block_forward.5} parent=39 // pred_region
        %s223 = smul.u32 4, %s15
        %p224 = scmp.lt.s32.totalorder %s223, 15
        %s225 = scalar_select %p224, %s223, 15
        %s226 = smul.addr %s225, 4
        %s227 = scalar_lea.vmem %s3, %s226
      $region44: #{basic_block_forward.5} parent=39 // pred_fallthru
        _
    $region40: #{basic_block_forward.5} parent=5 // pred_fallthru
      _
  $region6: #{basic_block_forward.5} parent=0 // loop_footer
    %s13 = sadd.s32 1, %s9
  $region7: #{basic_block_forward.5} parent=0 // loop_footer_branch
    %8 = sbr.rel target = $region3
  $region8: #{basic_block_forward.5} parent=0 // loop_exit
    _

// kernel: basic_block_forward.4
$region0: #{basic_block_forward.4}
  #allocation0 [shape = 'u32[]', space=smem, size = 0x4, offset = 0x4, fixed_abs, tag = 'smem constant byte address 0x4 - core index']
  #allocation1 [shape = 'u32[72,128]{1,0:T(1,128)}', space=vmem, size = 0x9000, scoped, tag = 'internal scratch']
  %s0 = inlined_call_operand.vmem [shape: bf16[128,128], index: 0, kind: input, shape index: {}]
  %s1 = inlined_call_operand.vmem [shape: bf16[128,128], index: 1, kind: input, shape index: {}]
  %s2 = inlined_call_operand.vmem [shape: bf16[128,128], index: 2, kind: output, shape index: {0}]
  %s3 = inlined_call_operand.vmem [shape: f32[32,128], index: 3, kind: output, shape index: {1}]
  %4 = xla_tuple %s2, %s3
  %s5 = sld [smem:[#allocation0]]
  $region49: #{basic_block_forward.4} parent=0
    _
  %s7 = ssub.s32 1, %s5
  %s8 = scalar_select 0, %s7, %s5
  loop: start=0, step=1, limit=6
  $region2: #{basic_block_forward.4} parent=0 // loop_pre_header
    _
  $region3: #{basic_block_forward.4} parent=0 // loop_header
    %s10 = sphi 0, %s14
    %p11 = scmp.ge.s32.totalorder %s10, 6
    %s20 = sphi 0, %s22
    %s23 = sphi 0, %s20
    %s24 = sphi 0, %s23
    %s40 = sphi 0, %s24
    %s44 = sphi 0, %s44
    %s46 = sphi 0, %s44
    %s47 = sphi 0, %s46
    %s61 = sphi 0, %s47
    %s67 = sphi 0, %s69
    %s70 = sphi 0, %s67
    %s71 = sphi 0, %s70
    %s87 = sphi 0, %s71
    %s93 = sphi 0, %s95
    %s96 = sphi 0, %s93
    %s97 = sphi 0, %s96
    %s113 = sphi 0, %s97
  $region4: #{basic_block_forward.4} parent=0 // loop_header_branch
    %13 = sbr.rel (%p11) target = $region8
  $region5: #{basic_block_forward.4} parent=0 // loop_body
    %s15 = ssub.s32 %s10, 1
    %s16 = ssub.s32 %s10, 2
    %s17 = sadd.s32 %s10, 1
    %s18 = ssub.s32 %s10, %s17
    %p19 = scmp.eq.s32.totalorder %s18, 0
    %s21 = sadd.s32 %s20, 1
    %s22 = scalar_select %p19, %s20, %s21
    %p25 = pneg %p19
    %p26 = scmp.eq.s32.totalorder %s10, 3
    %p27 = por %p25, %p26
    %p28 = scmp.ne.s32.totalorder %s20, %s23
    %p29 = scmp.eq.s32.totalorder %s10, 0
    %p30 = por %p28, %p29
    %p31 = scmp.ne.s32.totalorder %s20, %s23
    %p32 = scmp.eq.s32.totalorder %s15, 3
    %p33 = por %p31, %p32
    %p34 = scmp.ne.s32.totalorder %s23, %s24
    %p35 = scmp.eq.s32.totalorder %s15, 0
    %p36 = por %p34, %p35
    %p37 = scmp.ne.s32.totalorder %s23, %s24
    %p38 = scmp.eq.s32.totalorder %s16, 3
    %p39 = por %p37, %p38
    %p41 = scmp.ne.s32.totalorder %s24, %s40
    %p42 = scmp.eq.s32.totalorder %s16, 0
    %p43 = por %p41, %p42
    %s45 = sadd.s32 %s44, 1
    %p48 = scmp.eq.s32.totalorder %s10, 3
    %p49 = scmp.ne.s32.totalorder %s44, %s46
    %p50 = scmp.eq.s32.totalorder %s10, 0
    %p51 = por %p49, %p50
    %p52 = scmp.ne.s32.totalorder %s44, %s46
    %p53 = scmp.eq.s32.totalorder %s15, 3
    %p54 = por %p52, %p53
    %p55 = scmp.ne.s32.totalorder %s46, %s47
    %p56 = scmp.eq.s32.totalorder %s15, 0
    %p57 = por %p55, %p56
    %p58 = scmp.ne.s32.totalorder %s46, %s47
    %p59 = scmp.eq.s32.totalorder %s16, 3
    %p60 = por %p58, %p59
    %p62 = scmp.ne.s32.totalorder %s47, %s61
    %p63 = scmp.eq.s32.totalorder %s16, 0
    %p64 = por %p62, %p63
    %s65 = ssub.s32 %s10, %s17
    %p66 = scmp.eq.s32.totalorder %s65, 0
    %s68 = sadd.s32 %s67, 1
    %s69 = scalar_select %p66, %s67, %s68
    %p72 = pneg %p66
    %p73 = scmp.eq.s32.totalorder %s10, 3
    %p74 = por %p72, %p73
    %p75 = scmp.ne.s32.totalorder %s67, %s70
    %p76 = scmp.eq.s32.totalorder %s10, 0
    %p77 = por %p75, %p76
    %p78 = scmp.ne.s32.totalorder %s67, %s70
    %p79 = scmp.eq.s32.totalorder %s15, 3
    %p80 = por %p78, %p79
    %p81 = scmp.ne.s32.totalorder %s70, %s71
    %p82 = scmp.eq.s32.totalorder %s15, 0
    %p83 = por %p81, %p82
    %p84 = scmp.ne.s32.totalorder %s70, %s71
    %p85 = scmp.eq.s32.totalorder %s16, 3
    %p86 = por %p84, %p85
    %p88 = scmp.ne.s32.totalorder %s71, %s87
    %p89 = scmp.eq.s32.totalorder %s16, 0
    %p90 = por %p88, %p89
    %s91 = ssub.s32 %s10, %s17
    %p92 = scmp.eq.s32.totalorder %s91, 0
    %s94 = sadd.s32 %s93, 1
    %s95 = scalar_select %p92, %s93, %s94
    %p98 = pneg %p92
    %p99 = scmp.eq.s32.totalorder %s10, 3
    %p100 = por %p98, %p99
    %p101 = scmp.ne.s32.totalorder %s93, %s96
    %p102 = scmp.eq.s32.totalorder %s10, 0
    %p103 = por %p101, %p102
    %p104 = scmp.ne.s32.totalorder %s93, %s96
    %p105 = scmp.eq.s32.totalorder %s15, 3
    %p106 = por %p104, %p105
    %p107 = scmp.ne.s32.totalorder %s96, %s97
    %p108 = scmp.eq.s32.totalorder %s15, 0
    %p109 = por %p107, %p108
    %p110 = scmp.ne.s32.totalorder %s96, %s97
    %p111 = scmp.eq.s32.totalorder %s16, 3
    %p112 = por %p110, %p111
    %p114 = scmp.ne.s32.totalorder %s97, %s113
    %p115 = scmp.eq.s32.totalorder %s16, 0
    %p116 = por %p114, %p115
    %p117 = scmp.le.s32.totalorder 1, %s10
    %p118 = scmp.lt.s32.totalorder %s10, 5
    %p119 = pnand %p117, %p118
    %p120 = pneg %p119
    // Predicated region
    $region9: #{basic_block_forward.4} parent=5 // pred_check
      _
    $region10: #{basic_block_forward.4} parent=5 // pred_check_branch
      %122 = sbr.rel (%p119) target = $region12
    $region11: #{basic_block_forward.4} parent=5 // pred_region
      %s123 = ssub.s32 %s10, 1
      // Predicated region
      $region13: #{basic_block_forward.4} parent=11 // pred_check
        %p124 = pneg %p57
      $region14: #{basic_block_forward.4} parent=11 // pred_check_branch
        %126 = sbr.rel (%p124) target = $region16
      $region15: #{basic_block_forward.4} parent=11 // pred_region
        _
      $region16: #{basic_block_forward.4} parent=11 // pred_fallthru
        _
    $region12: #{basic_block_forward.4} parent=5 // pred_fallthru
      _
    %p127 = scmp.lt.s32.totalorder %s10, 4
    // Predicated region
    $region17: #{basic_block_forward.4} parent=5 // pred_check
      %p128 = pneg %p127
    $region18: #{basic_block_forward.4} parent=5 // pred_check_branch
      %130 = sbr.rel (%p128) target = $region20
    $region19: #{basic_block_forward.4} parent=5 // pred_region
      // Predicated region
      $region21: #{basic_block_forward.4} parent=19 // pred_check
        %p131 = pneg %p30
      $region22: #{basic_block_forward.4} parent=19 // pred_check_branch
        %133 = sbr.rel (%p131) target = $region24
      $region23: #{basic_block_forward.4} parent=19 // pred_region
        %s134 = smul.u32 4, %s10
        %p135 = scmp.lt.s32.totalorder %s134, 15
        %s136 = scalar_select %p135, %s134, 15
        %s137 = smul.addr %s136, 4
        %s138 = scalar_lea.vmem %s0, %s137
        %s139 = smul.u32 4, %s10
      $region24: #{basic_block_forward.4} parent=19 // pred_fallthru
        _
    $region20: #{basic_block_forward.4} parent=5 // pred_fallthru
      _
    %p140 = scmp.le.s32.totalorder 1, %s10
    %p141 = scmp.lt.s32.totalorder %s10, 5
    %p142 = pnand %p140, %p141
    %p143 = pneg %p142
    // Predicated region
    $region25: #{basic_block_forward.4} parent=5 // pred_check
      _
    $region26: #{basic_block_forward.4} parent=5 // pred_check_branch
      %145 = sbr.rel (%p142) target = $region28
    $region27: #{basic_block_forward.4} parent=5 // pred_region
      %s146 = ssub.s32 %s10, 1
      %s147 = smul.u32 4, %s15
      %p148 = scmp.lt.s32.totalorder %s147, 15
      %s149 = scalar_select %p148, %s147, 15
      %s150 = smul.addr %s149, 4
      %s151 = scalar_lea.vmem %s0, %s150
      %p152 = pneg %p36
      %p153 = pneg %p33
      %p154 = pneg %p57
      %p155 = pneg %p54
      %p156 = pneg %p83
      %p157 = pneg %p80
      %s158 = smul.u32 4, %s15
      %p159 = scmp.lt.s32.totalorder %s158, 15
      %s160 = scalar_select %p159, %s158, 15
      %s161 = smul.addr %s160, 4
      %s162 = scalar_lea.vmem %s2, %s161
      %p163 = pneg %p109
      %p164 = pneg %p106
      %p165 = scmp.lt.s32.totalorder %s15, 3
      %s166 = scalar_select %p165, %s15, 3
      %s167 = smul.addr %s166, 8
      %s168 = scalar_lea.vmem %s3, %s167
      %s169 = smul.u32 4, %s15
      %p170 = scmp.lt.s32.totalorder %s169, 15
      %s171 = scalar_select %p170, %s169, 15
      %s172 = smul.addr %s171, 4
      %s173 = scalar_lea.vmem %s0, %s172
      %s174 = smul.u32 4, %s15
      %s175 = smul.u32 4, %s15
      %p176 = scmp.lt.s32.totalorder %s175, 15
      %s177 = scalar_select %p176, %s175, 15
      %s178 = smul.addr %s177, 4
      %s179 = scalar_lea.vmem %s2, %s178
      %s180 = smul.u32 4, %s15
      %p181 = scmp.lt.s32.totalorder %s15, 3
      %s182 = scalar_select %p181, %s15, 3
      %s183 = smul.addr %s182, 8
      %s184 = scalar_lea.vmem %s3, %s183
      %v185 = vld [vmem:[%s173] sm:$0xf]
      %v186 = vld [vmem:[%s173 + $0x4] sm:$0xf]
      %v187 = vld [vmem:[%s173 + $0x8] sm:$0xf]
      %v188 = vld [vmem:[%s173 + $0xc] sm:$0xf]
      %v189 = vld [vmem:[%s1] sm:$0xf]
      %v190 = vld [vmem:[%s1 + $0x4] sm:$0xf]
      %v191 = vld [vmem:[%s1 + $0x8] sm:$0xf]
      %v192 = vld [vmem:[%s1 + $0xc] sm:$0xf]
      %v193 = vld [vmem:[%s1 + $0x10] sm:$0xf]
      %v194 = vld [vmem:[%s1 + $0x14] sm:$0xf]
      %v195 = vld [vmem:[%s1 + $0x18] sm:$0xf]
      %v196 = vld [vmem:[%s1 + $0x1c] sm:$0xf]
      %v197 = vld [vmem:[%s1 + $0x20] sm:$0xf]
      %v198 = vld [vmem:[%s1 + $0x24] sm:$0xf]
      %v199 = vld [vmem:[%s1 + $0x28] sm:$0xf]
      %v200 = vld [vmem:[%s1 + $0x2c] sm:$0xf]
      %v201 = vld [vmem:[%s1 + $0x30] sm:$0xf]
      %v202 = vld [vmem:[%s1 + $0x34] sm:$0xf]
      %v203 = vld [vmem:[%s1 + $0x38] sm:$0xf]
      %v204 = vld [vmem:[%s1 + $0x3c] sm:$0xf]
      %v209 = vunpack.c.l.b16 %v185
      %v210 = vunpack.c.l.b16 %v186
      %v211 = vunpack.c.l.b16 %v187
      %v212 = vunpack.c.l.b16 %v188
      %v213 = vpack.c.b16 %v210, %v209
      %v214 = vpack.c.b16 %v212, %v211
      %v233 = vunpack.c.l.b16 %v189
      %v234 = vunpack.c.l.b16 %v190
      %v235 = vunpack.c.l.b16 %v191
      %v236 = vunpack.c.l.b16 %v192
      %v237 = vunpack.c.l.b16 %v193
      %v238 = vunpack.c.l.b16 %v194
      %v239 = vunpack.c.l.b16 %v195
      %v240 = vunpack.c.l.b16 %v196
      %v241 = vunpack.c.l.b16 %v197
      %v242 = vunpack.c.l.b16 %v198
      %v243 = vunpack.c.l.b16 %v199
      %v244 = vunpack.c.l.b16 %v200
      %v245 = vunpack.c.l.b16 %v201
      %v246 = vunpack.c.l.b16 %v202
      %v247 = vunpack.c.l.b16 %v203
      %v248 = vunpack.c.l.b16 %v204
      %v249 = vpack.c.b16 %v234, %v233
      %v250 = vpack.c.b16 %v236, %v235
      %v251 = vpack.c.b16 %v238, %v237
      %v252 = vpack.c.b16 %v240, %v239
      %v253 = vpack.c.b16 %v242, %v241
      %v254 = vpack.c.b16 %v244, %v243
      %v255 = vpack.c.b16 %v246, %v245
      %v256 = vpack.c.b16 %v248, %v247
      %265 = vmatpush.bf16.msra.mxu0 %v256
      %266 = vmatpush.bf16.msra.mxu0 %v255
      %267 = vmatpush.bf16.msra.mxu0 %v254
      %268 = vmatpush.bf16.msra.mxu0 %v253
      %269 = vmatpush.bf16.msra.mxu0 %v252
      %270 = vmatpush.bf16.msra.mxu0 %v251
      %271 = vmatpush.bf16.msra.mxu0 %v250
      %272 = vmatpush.bf16.msra.mxu0 %v249
      %273 = vmatmul.bf16.gmra.mxu0 %v213
      %v274 = vpop.f32.mrf.mxu0
      %v275 = vadd.f32 0.0, %v274
      %v276 = vpop.f32.mrf.mxu0
      %v277 = vadd.f32 0.0, %v276
      %278 = vmatmul.bf16.gmra.mxu0 %v214
      %v279 = vpop.f32.mrf.mxu0
      %v280 = vadd.f32 0.0, %v279
      %v281 = vpop.f32.mrf.mxu0
      %v282 = vadd.f32 0.0, %v281
      %283 = vdwg.mxu0
      %v284 = vpack.c.bf16 %v275, %v275
      %v285 = vpack.c.bf16 %v277, %v277
      %v286 = vpack.c.bf16 %v280, %v280
      %v287 = vpack.c.bf16 %v282, %v282
      %288 = vst [vmem:[%s179] sm:$0xf] %v284
      %289 = vst [vmem:[%s179 + $0x4] sm:$0xf] %v285
      %290 = vst [vmem:[%s179 + $0x8] sm:$0xf] %v286
      %291 = vst [vmem:[%s179 + $0xc] sm:$0xf] %v287
      %v292 = vadd.f32 %v275, %v277
      %v293 = vadd.f32 %v292, %v280
      %v294 = vadd.f32 %v293, %v282
      %v295 = vrot.slane %v294, 4
      %v296 = vadd.f32 %v294, %v295
      %v297 = vrot.slane %v296, 2
      %v298 = vadd.f32 %v296, %v297
      %v299 = vrot.slane %v298, 1
      %v300 = vadd.f32 %v298, %v299
      %v301 = vmul.f32 %v275, %v275
      %v302 = vmul.f32 %v277, %v277
      %v303 = vmul.f32 %v280, %v280
      %v304 = vmul.f32 %v282, %v282
      %v305 = vadd.f32 %v301, %v302
      %v306 = vadd.f32 %v305, %v303
      %v307 = vadd.f32 %v306, %v304
      %v308 = vrot.slane %v307, 4
      %v309 = vadd.f32 %v307, %v308
      %v310 = vrot.slane %v309, 2
      %v311 = vadd.f32 %v309, %v310
      %v312 = vrot.slane %v311, 1
      %v313 = vadd.f32 %v311, %v312
      %vm314 = vcmask 1040384
      %v315 = vsel %vm314, %v300, %v313
      %vm316 = vcmask 1041408
      %v317 = vsel %vm316, %v315, 0.0
      %318 = vst [vmem:[%s184] sm:$0xff] %v317
      %s319 = smul.u32 4, %s15
      %p320 = scmp.lt.s32.totalorder %s319, 15
      %s321 = scalar_select %p320, %s319, 15
      %s322 = smul.addr %s321, 4
      %s323 = scalar_lea.vmem %s2, %s322
      %p324 = scmp.lt.s32.totalorder %s15, 3
      %s325 = scalar_select %p324, %s15, 3
      %s326 = smul.addr %s325, 8
      %s327 = scalar_lea.vmem %s3, %s326
      // Predicated region
      $region29: #{basic_block_forward.4} parent=27 // pred_check
        %p328 = pneg %p80
      $region30: #{basic_block_forward.4} parent=27 // pred_check_branch
        %330 = sbr.rel (%p328) target = $region32
      $region31: #{basic_block_forward.4} parent=27 // pred_region
        %s331 = smul.u32 4, %s15
      $region32: #{basic_block_forward.4} parent=27 // pred_fallthru
        _
      // Predicated region
      $region33: #{basic_block_forward.4} parent=27 // pred_check
        %p332 = pneg %p106
      $region34: #{basic_block_forward.4} parent=27 // pred_check_branch
        %334 = sbr.rel (%p332) target = $region36
      $region35: #{basic_block_forward.4} parent=27 // pred_region
        _
      $region36: #{basic_block_forward.4} parent=27 // pred_fallthru
        _
    $region28: #{basic_block_forward.4} parent=5 // pred_fallthru
      _
    %p335 = scmp.le.s32.totalorder 2, %s10
    // Predicated region
    $region37: #{basic_block_forward.4} parent=5 // pred_check
      %p336 = pneg %p335
    $region38: #{basic_block_forward.4} parent=5 // pred_check_branch
      %338 = sbr.rel (%p336) target = $region40
    $region39: #{basic_block_forward.4} parent=5 // pred_region
      %s339 = ssub.s32 %s10, 2
      // Predicated region
      $region41: #{basic_block_forward.4} parent=39 // pred_check
        %p340 = pneg %p86
      $region42: #{basic_block_forward.4} parent=39 // pred_check_branch
        %342 = sbr.rel (%p340) target = $region44
      $region43: #{basic_block_forward.4} parent=39 // pred_region
        %s343 = smul.u32 4, %s16
        %p344 = scmp.lt.s32.totalorder %s343, 15
        %s345 = scalar_select %p344, %s343, 15
        %s346 = smul.addr %s345, 4
        %s347 = scalar_lea.vmem %s2, %s346
      $region44: #{basic_block_forward.4} parent=39 // pred_fallthru
        _
      // Predicated region
      $region45: #{basic_block_forward.4} parent=39 // pred_check
        %p348 = pneg %p112
      $region46: #{basic_block_forward.4} parent=39 // pred_check_branch
        %350 = sbr.rel (%p348) target = $region48
      $region47: #{basic_block_forward.4} parent=39 // pred_region
        %p351 = scmp.lt.s32.totalorder %s16, 3
        %s352 = scalar_select %p351, %s16, 3
        %s353 = smul.addr %s352, 8
        %s354 = scalar_lea.vmem %s3, %s353
      $region48: #{basic_block_forward.4} parent=39 // pred_fallthru
        _
    $region40: #{basic_block_forward.4} parent=5 // pred_fallthru
      _
  $region6: #{basic_block_forward.4} parent=0 // loop_footer
    %s14 = sadd.s32 1, %s10
  $region7: #{basic_block_forward.4} parent=0 // loop_footer_branch
    %9 = sbr.rel target = $region3
  $region8: #{basic_block_forward.4} parent=0 // loop_exit
    _

// kernel: basic_block_forward.7
$region0: #{basic_block_forward.7}
  #allocation0 [shape = 'u32[]', space=smem, size = 0x4, offset = 0x4, fixed_abs, tag = 'smem constant byte address 0x4 - core index']
  #allocation1 [shape = 'u32[72,128]{1,0:T(1,128)}', space=vmem, size = 0x9000, scoped, tag = 'internal scratch']
  %s0 = inlined_call_operand.vmem [shape: bf16[128,128], index: 0, kind: input, shape index: {}]
  %s1 = inlined_call_operand.vmem [shape: f32[8,128], index: 1, kind: input, shape index: {}]
  %s2 = inlined_call_operand.vmem [shape: f32[8,128], index: 2, kind: input, shape index: {}]
  %s3 = inlined_call_operand.vmem [shape: bf16[128,128], index: 3, kind: input, shape index: {}]
  %s4 = inlined_call_operand.vmem [shape: f32[8,128], index: 4, kind: input, shape index: {}]
  %s5 = inlined_call_operand.vmem [shape: f32[8,128], index: 5, kind: input, shape index: {}]
  %s6 = inlined_call_operand.vmem [shape: bf16[128,128], index: 6, kind: output, shape index: {}]
  %s7 = sld [smem:[#allocation0]]
  $region57: #{basic_block_forward.7} parent=0
    _
  %s9 = ssub.s32 1, %s7
  %s10 = scalar_select 0, %s9, %s7
  loop: start=0, step=1, limit=6
  $region2: #{basic_block_forward.7} parent=0 // loop_pre_header
    _
  $region3: #{basic_block_forward.7} parent=0 // loop_header
    %s12 = sphi 0, %s16
    %p13 = scmp.ge.s32.totalorder %s12, 6
    %s22 = sphi 0, %s24
    %s25 = sphi 0, %s22
    %s26 = sphi 0, %s25
    %s42 = sphi 0, %s26
    %s46 = sphi 0, %s46
    %s48 = sphi 0, %s46
    %s49 = sphi 0, %s48
    %s63 = sphi 0, %s49
    %s67 = sphi 0, %s67
    %s69 = sphi 0, %s67
    %s70 = sphi 0, %s69
    %s84 = sphi 0, %s70
    %s90 = sphi 0, %s92
    %s93 = sphi 0, %s90
    %s94 = sphi 0, %s93
    %s110 = sphi 0, %s94
    %s114 = sphi 0, %s114
    %s116 = sphi 0, %s114
    %s117 = sphi 0, %s116
    %s131 = sphi 0, %s117
    %s135 = sphi 0, %s135
    %s137 = sphi 0, %s135
    %s138 = sphi 0, %s137
    %s152 = sphi 0, %s138
    %s158 = sphi 0, %s160
    %s161 = sphi 0, %s158
    %s162 = sphi 0, %s161
    %s178 = sphi 0, %s162
  $region4: #{basic_block_forward.7} parent=0 // loop_header_branch
    %15 = sbr.rel (%p13) target = $region8
  $region5: #{basic_block_forward.7} parent=0 // loop_body
    %s17 = ssub.s32 %s12, 1
    %s18 = ssub.s32 %s12, 2
    %s19 = sadd.s32 %s12, 1
    %s20 = ssub.s32 %s12, %s19
    %p21 = scmp.eq.s32.totalorder %s20, 0
    %s23 = sadd.s32 %s22, 1
    %s24 = scalar_select %p21, %s22, %s23
    %p27 = pneg %p21
    %p28 = scmp.eq.s32.totalorder %s12, 3
    %p29 = por %p27, %p28
    %p30 = scmp.ne.s32.totalorder %s22, %s25
    %p31 = scmp.eq.s32.totalorder %s12, 0
    %p32 = por %p30, %p31
    %p33 = scmp.ne.s32.totalorder %s22, %s25
    %p34 = scmp.eq.s32.totalorder %s17, 3
    %p35 = por %p33, %p34
    %p36 = scmp.ne.s32.totalorder %s25, %s26
    %p37 = scmp.eq.s32.totalorder %s17, 0
    %p38 = por %p36, %p37
    %p39 = scmp.ne.s32.totalorder %s25, %s26
    %p40 = scmp.eq.s32.totalorder %s18, 3
    %p41 = por %p39, %p40
    %p43 = scmp.ne.s32.totalorder %s26, %s42
    %p44 = scmp.eq.s32.totalorder %s18, 0
    %p45 = por %p43, %p44
    %s47 = sadd.s32 %s46, 1
    %p50 = scmp.eq.s32.totalorder %s12, 3
    %p51 = scmp.ne.s32.totalorder %s46, %s48
    %p52 = scmp.eq.s32.totalorder %s12, 0
    %p53 = por %p51, %p52
    %p54 = scmp.ne.s32.totalorder %s46, %s48
    %p55 = scmp.eq.s32.totalorder %s17, 3
    %p56 = por %p54, %p55
    %p57 = scmp.ne.s32.totalorder %s48, %s49
    %p58 = scmp.eq.s32.totalorder %s17, 0
    %p59 = por %p57, %p58
    %p60 = scmp.ne.s32.totalorder %s48, %s49
    %p61 = scmp.eq.s32.totalorder %s18, 3
    %p62 = por %p60, %p61
    %p64 = scmp.ne.s32.totalorder %s49, %s63
    %p65 = scmp.eq.s32.totalorder %s18, 0
    %p66 = por %p64, %p65
    %s68 = sadd.s32 %s67, 1
    %p71 = scmp.eq.s32.totalorder %s12, 3
    %p72 = scmp.ne.s32.totalorder %s67, %s69
    %p73 = scmp.eq.s32.totalorder %s12, 0
    %p74 = por %p72, %p73
    %p75 = scmp.ne.s32.totalorder %s67, %s69
    %p76 = scmp.eq.s32.totalorder %s17, 3
    %p77 = por %p75, %p76
    %p78 = scmp.ne.s32.totalorder %s69, %s70
    %p79 = scmp.eq.s32.totalorder %s17, 0
    %p80 = por %p78, %p79
    %p81 = scmp.ne.s32.totalorder %s69, %s70
    %p82 = scmp.eq.s32.totalorder %s18, 3
    %p83 = por %p81, %p82
    %p85 = scmp.ne.s32.totalorder %s70, %s84
    %p86 = scmp.eq.s32.totalorder %s18, 0
    %p87 = por %p85, %p86
    %s88 = ssub.s32 %s12, %s19
    %p89 = scmp.eq.s32.totalorder %s88, 0
    %s91 = sadd.s32 %s90, 1
    %s92 = scalar_select %p89, %s90, %s91
    %p95 = pneg %p89
    %p96 = scmp.eq.s32.totalorder %s12, 3
    %p97 = por %p95, %p96
    %p98 = scmp.ne.s32.totalorder %s90, %s93
    %p99 = scmp.eq.s32.totalorder %s12, 0
    %p100 = por %p98, %p99
    %p101 = scmp.ne.s32.totalorder %s90, %s93
    %p102 = scmp.eq.s32.totalorder %s17, 3
    %p103 = por %p101, %p102
    %p104 = scmp.ne.s32.totalorder %s93, %s94
    %p105 = scmp.eq.s32.totalorder %s17, 0
    %p106 = por %p104, %p105
    %p107 = scmp.ne.s32.totalorder %s93, %s94
    %p108 = scmp.eq.s32.totalorder %s18, 3
    %p109 = por %p107, %p108
    %p111 = scmp.ne.s32.totalorder %s94, %s110
    %p112 = scmp.eq.s32.totalorder %s18, 0
    %p113 = por %p111, %p112
    %s115 = sadd.s32 %s114, 1
    %p118 = scmp.eq.s32.totalorder %s12, 3
    %p119 = scmp.ne.s32.totalorder %s114, %s116
    %p120 = scmp.eq.s32.totalorder %s12, 0
    %p121 = por %p119, %p120
    %p122 = scmp.ne.s32.totalorder %s114, %s116
    %p123 = scmp.eq.s32.totalorder %s17, 3
    %p124 = por %p122, %p123
    %p125 = scmp.ne.s32.totalorder %s116, %s117
    %p126 = scmp.eq.s32.totalorder %s17, 0
    %p127 = por %p125, %p126
    %p128 = scmp.ne.s32.totalorder %s116, %s117
    %p129 = scmp.eq.s32.totalorder %s18, 3
    %p130 = por %p128, %p129
    %p132 = scmp.ne.s32.totalorder %s117, %s131
    %p133 = scmp.eq.s32.totalorder %s18, 0
    %p134 = por %p132, %p133
    %s136 = sadd.s32 %s135, 1
    %p139 = scmp.eq.s32.totalorder %s12, 3
    %p140 = scmp.ne.s32.totalorder %s135, %s137
    %p141 = scmp.eq.s32.totalorder %s12, 0
    %p142 = por %p140, %p141
    %p143 = scmp.ne.s32.totalorder %s135, %s137
    %p144 = scmp.eq.s32.totalorder %s17, 3
    %p145 = por %p143, %p144
    %p146 = scmp.ne.s32.totalorder %s137, %s138
    %p147 = scmp.eq.s32.totalorder %s17, 0
    %p148 = por %p146, %p147
    %p149 = scmp.ne.s32.totalorder %s137, %s138
    %p150 = scmp.eq.s32.totalorder %s18, 3
    %p151 = por %p149, %p150
    %p153 = scmp.ne.s32.totalorder %s138, %s152
    %p154 = scmp.eq.s32.totalorder %s18, 0
    %p155 = por %p153, %p154
    %s156 = ssub.s32 %s12, %s19
    %p157 = scmp.eq.s32.totalorder %s156, 0
    %s159 = sadd.s32 %s158, 1
    %s160 = scalar_select %p157, %s158, %s159
    %p163 = pneg %p157
    %p164 = scmp.eq.s32.totalorder %s12, 3
    %p165 = por %p163, %p164
    %p166 = scmp.ne.s32.totalorder %s158, %s161
    %p167 = scmp.eq.s32.totalorder %s12, 0
    %p168 = por %p166, %p167
    %p169 = scmp.ne.s32.totalorder %s158, %s161
    %p170 = scmp.eq.s32.totalorder %s17, 3
    %p171 = por %p169, %p170
    %p172 = scmp.ne.s32.totalorder %s161, %s162
    %p173 = scmp.eq.s32.totalorder %s17, 0
    %p174 = por %p172, %p173
    %p175 = scmp.ne.s32.totalorder %s161, %s162
    %p176 = scmp.eq.s32.totalorder %s18, 3
    %p177 = por %p175, %p176
    %p179 = scmp.ne.s32.totalorder %s162, %s178
    %p180 = scmp.eq.s32.totalorder %s18, 0
    %p181 = por %p179, %p180
    %p182 = scmp.le.s32.totalorder 1, %s12
    %p183 = scmp.lt.s32.totalorder %s12, 5
    %p184 = pnand %p182, %p183
    %p185 = pneg %p184
    // Predicated region
    $region9: #{basic_block_forward.7} parent=5 // pred_check
      _
    $region10: #{basic_block_forward.7} parent=5 // pred_check_branch
      %187 = sbr.rel (%p184) target = $region12
    $region11: #{basic_block_forward.7} parent=5 // pred_region
      %s188 = ssub.s32 %s12, 1
      // Predicated region
      $region13: #{basic_block_forward.7} parent=11 // pred_check
        %p189 = pneg %p59
      $region14: #{basic_block_forward.7} parent=11 // pred_check_branch
        %191 = sbr.rel (%p189) target = $region16
      $region15: #{basic_block_forward.7} parent=11 // pred_region
        _
      $region16: #{basic_block_forward.7} parent=11 // pred_fallthru
        _
      // Predicated region
      $region17: #{basic_block_forward.7} parent=11 // pred_check
        %p192 = pneg %p80
      $region18: #{basic_block_forward.7} parent=11 // pred_check_branch
        %194 = sbr.rel (%p192) target = $region20
      $region19: #{basic_block_forward.7} parent=11 // pred_region
        _
      $region20: #{basic_block_forward.7} parent=11 // pred_fallthru
        _
      // Predicated region
      $region21: #{basic_block_forward.7} parent=11 // pred_check
        %p195 = pneg %p127
      $region22: #{basic_block_forward.7} parent=11 // pred_check_branch
        %197 = sbr.rel (%p195) target = $region24
      $region23: #{basic_block_forward.7} parent=11 // pred_region
        _
      $region24: #{basic_block_forward.7} parent=11 // pred_fallthru
        _
      // Predicated region
      $region25: #{basic_block_forward.7} parent=11 // pred_check
        %p198 = pneg %p148
      $region26: #{basic_block_forward.7} parent=11 // pred_check_branch
        %200 = sbr.rel (%p198) target = $region28
      $region27: #{basic_block_forward.7} parent=11 // pred_region
        _
      $region28: #{basic_block_forward.7} parent=11 // pred_fallthru
        _
    $region12: #{basic_block_forward.7} parent=5 // pred_fallthru
      _
    %p201 = scmp.lt.s32.totalorder %s12, 4
    // Predicated region
    $region29: #{basic_block_forward.7} parent=5 // pred_check
      %p202 = pneg %p201
    $region30: #{basic_block_forward.7} parent=5 // pred_check_branch
      %204 = sbr.rel (%p202) target = $region32
    $region31: #{basic_block_forward.7} parent=5 // pred_region
      // Predicated region
      $region33: #{basic_block_forward.7} parent=31 // pred_check
        %p205 = pneg %p32
      $region34: #{basic_block_forward.7} parent=31 // pred_check_branch
        %207 = sbr.rel (%p205) target = $region36
      $region35: #{basic_block_forward.7} parent=31 // pred_region
        %s208 = smul.u32 4, %s12
        %p209 = scmp.lt.s32.totalorder %s208, 15
        %s210 = scalar_select %p209, %s208, 15
        %s211 = smul.addr %s210, 4
        %s212 = scalar_lea.vmem %s0, %s211
        %s213 = smul.u32 4, %s12
      $region36: #{basic_block_forward.7} parent=31 // pred_fallthru
        _
      // Predicated region
      $region37: #{basic_block_forward.7} parent=31 // pred_check
        %p214 = pneg %p100
      $region38: #{basic_block_forward.7} parent=31 // pred_check_branch
        %216 = sbr.rel (%p214) target = $region40
      $region39: #{basic_block_forward.7} parent=31 // pred_region
        %s217 = smul.u32 4, %s12
        %p218 = scmp.lt.s32.totalorder %s217, 15
        %s219 = scalar_select %p218, %s217, 15
        %s220 = smul.addr %s219, 4
        %s221 = scalar_lea.vmem %s3, %s220
        %s222 = smul.u32 4, %s12
      $region40: #{basic_block_forward.7} parent=31 // pred_fallthru
        _
    $region32: #{basic_block_forward.7} parent=5 // pred_fallthru
      _
    %p223 = scmp.le.s32.totalorder 1, %s12
    %p224 = scmp.lt.s32.totalorder %s12, 5
    %p225 = pnand %p223, %p224
    %p226 = pneg %p225
    // Predicated region
    $region41: #{basic_block_forward.7} parent=5 // pred_check
      _
    $region42: #{basic_block_forward.7} parent=5 // pred_check_branch
      %228 = sbr.rel (%p225) target = $region44
    $region43: #{basic_block_forward.7} parent=5 // pred_region
      %s229 = ssub.s32 %s12, 1
      %s230 = smul.u32 4, %s17
      %p231 = scmp.lt.s32.totalorder %s230, 15
      %s232 = scalar_select %p231, %s230, 15
      %s233 = smul.addr %s232, 4
      %s234 = scalar_lea.vmem %s0, %s233
      %p235 = pneg %p38
      %p236 = pneg %p35
      %p237 = pneg %p59
      %p238 = pneg %p56
      %p239 = pneg %p80
      %p240 = pneg %p77
      %s241 = smul.u32 4, %s17
      %p242 = scmp.lt.s32.totalorder %s241, 15
      %s243 = scalar_select %p242, %s241, 15
      %s244 = smul.addr %s243, 4
      %s245 = scalar_lea.vmem %s3, %s244
      %p246 = pneg %p106
      %p247 = pneg %p103
      %p248 = pneg %p127
      %p249 = pneg %p124
      %p250 = pneg %p148
      %p251 = pneg %p145
      %p252 = pneg %p174
      %p253 = pneg %p171
      %s254 = smul.u32 4, %s17
      %p255 = scmp.lt.s32.totalorder %s254, 15
      %s256 = scalar_select %p255, %s254, 15
      %s257 = smul.addr %s256, 4
      %s258 = scalar_lea.vmem %s6, %s257
      %s259 = smul.u32 4, %s17
      %p260 = scmp.lt.s32.totalorder %s259, 15
      %s261 = scalar_select %p260, %s259, 15
      %s262 = smul.addr %s261, 4
      %s263 = scalar_lea.vmem %s0, %s262
      %s264 = smul.u32 4, %s17
      %s265 = smul.u32 4, %s17
      %p266 = scmp.lt.s32.totalorder %s265, 15
      %s267 = scalar_select %p266, %s265, 15
      %s268 = smul.addr %s267, 4
      %s269 = scalar_lea.vmem %s3, %s268
      %s270 = smul.u32 4, %s17
      %s271 = smul.u32 4, %s17
      %p272 = scmp.lt.s32.totalorder %s271, 15
      %s273 = scalar_select %p272, %s271, 15
      %s274 = smul.addr %s273, 4
      %s275 = scalar_lea.vmem %s6, %s274
      %s276 = smul.u32 4, %s17
      %v277 = vld [vmem:[%s263] sm:$0xf]
      %v278 = vld [vmem:[%s263 + $0x4] sm:$0xf]
      %v279 = vld [vmem:[%s263 + $0x8] sm:$0xf]
      %v280 = vld [vmem:[%s263 + $0xc] sm:$0xf]
      %v281 = vunpack.c.l.bf16 %v277
      %v282 = vunpack.c.l.bf16 %v278
      %v283 = vunpack.c.l.bf16 %v279
      %v284 = vunpack.c.l.bf16 %v280
      %v285 = vld [vmem:[%s1] sm:$0x1]
      %v286 = vperm.slane %v285, 0
      %v287 = vmul.f32 %v281, %v286
      %v288 = vmul.f32 %v282, %v286
      %v289 = vmul.f32 %v283, %v286
      %v290 = vmul.f32 %v284, %v286
      %v291 = vld [vmem:[%s2] sm:$0x1]
      %v292 = vperm.slane %v291, 0
      %v293 = vadd.f32 %v287, %v292
      %v294 = vadd.f32 %v288, %v292
      %v295 = vadd.f32 %v289, %v292
      %v296 = vadd.f32 %v290, %v292
      %v297 = vld [vmem:[%s269] sm:$0xf]
      %v298 = vld [vmem:[%s269 + $0x4] sm:$0xf]
      %v299 = vld [vmem:[%s269 + $0x8] sm:$0xf]
      %v300 = vld [vmem:[%s269 + $0xc] sm:$0xf]
      %v301 = vunpack.c.l.bf16 %v297
      %v302 = vunpack.c.l.bf16 %v298
      %v303 = vunpack.c.l.bf16 %v299
      %v304 = vunpack.c.l.bf16 %v300
      %v305 = vld [vmem:[%s4] sm:$0x1]
      %v306 = vperm.slane %v305, 0
      %v307 = vmul.f32 %v301, %v306
      %v308 = vmul.f32 %v302, %v306
      %v309 = vmul.f32 %v303, %v306
      %v310 = vmul.f32 %v304, %v306
      %v311 = vld [vmem:[%s5] sm:$0x1]
      %v312 = vperm.slane %v311, 0
      %v313 = vadd.f32 %v307, %v312
      %v314 = vadd.f32 %v308, %v312
      %v315 = vadd.f32 %v309, %v312
      %v316 = vadd.f32 %v310, %v312
      %v317 = vadd.f32 %v293, %v313
      %v318 = vadd.f32 %v294, %v314
      %v319 = vadd.f32 %v295, %v315
      %v320 = vadd.f32 %v296, %v316
      %v321 = vmax.f32 %v317, 0.0
      %v322 = vmax.f32 %v318, 0.0
      %v323 = vmax.f32 %v319, 0.0
      %v324 = vmax.f32 %v320, 0.0
      %v325 = vpack.c.bf16 %v321, %v321
      %v326 = vpack.c.bf16 %v322, %v322
      %v327 = vpack.c.bf16 %v323, %v323
      %v328 = vpack.c.bf16 %v324, %v324
      %329 = vst [vmem:[%s275] sm:$0xf] %v325
      %330 = vst [vmem:[%s275 + $0x4] sm:$0xf] %v326
      %331 = vst [vmem:[%s275 + $0x8] sm:$0xf] %v327
      %332 = vst [vmem:[%s275 + $0xc] sm:$0xf] %v328
      %s333 = smul.u32 4, %s17
      %p334 = scmp.lt.s32.totalorder %s333, 15
      %s335 = scalar_select %p334, %s333, 15
      %s336 = smul.addr %s335, 4
      %s337 = scalar_lea.vmem %s6, %s336
      // Predicated region
      $region45: #{basic_block_forward.7} parent=43 // pred_check
        %p338 = pneg %p171
      $region46: #{basic_block_forward.7} parent=43 // pred_check_branch
        %340 = sbr.rel (%p338) target = $region48
      $region47: #{basic_block_forward.7} parent=43 // pred_region
        %s341 = smul.u32 4, %s17
      $region48: #{basic_block_forward.7} parent=43 // pred_fallthru
        _
    $region44: #{basic_block_forward.7} parent=5 // pred_fallthru
      _
    %p342 = scmp.le.s32.totalorder 2, %s12
    // Predicated region
    $region49: #{basic_block_forward.7} parent=5 // pred_check
      %p343 = pneg %p342
    $region50: #{basic_block_forward.7} parent=5 // pred_check_branch
      %345 = sbr.rel (%p343) target = $region52
    $region51: #{basic_block_forward.7} parent=5 // pred_region
      %s346 = ssub.s32 %s12, 2
      // Predicated region
      $region53: #{basic_block_forward.7} parent=51 // pred_check
        %p347 = pneg %p177
      $region54: #{basic_block_forward.7} parent=51 // pred_check_branch
        %349 = sbr.rel (%p347) target = $region56
      $region55: #{basic_block_forward.7} parent=51 // pred_region
        %s350 = smul.u32 4, %s18
        %p351 = scmp.lt.s32.totalorder %s350, 15
        %s352 = scalar_select %p351, %s350, 15
        %s353 = smul.addr %s352, 4
        %s354 = scalar_lea.vmem %s6, %s353
      $region56: #{basic_block_forward.7} parent=51 // pred_fallthru
        _
    $region52: #{basic_block_forward.7} parent=5 // pred_fallthru
      _
  $region6: #{basic_block_forward.7} parent=0 // loop_footer
    %s16 = sadd.s32 1, %s12
  $region7: #{basic_block_forward.7} parent=0 // loop_footer_branch
    %11 = sbr.rel target = $region3
  $region8: #{basic_block_forward.7} parent=0 // loop_exit
    _

// kernel: basic_block_forward.6
$region0: #{basic_block_forward.6}
  #allocation0 [shape = 'u32[]', space=smem, size = 0x4, offset = 0x4, fixed_abs, tag = 'smem constant byte address 0x4 - core index']
  #allocation1 [shape = 'u32[72,128]{1,0:T(1,128)}', space=vmem, size = 0x9000, scoped, tag = 'internal scratch']
  %s0 = inlined_call_operand.vmem [shape: bf16[128,1152], index: 0, kind: input, shape index: {}]
  %s1 = inlined_call_operand.vmem [shape: bf16[1152,128], index: 1, kind: input, shape index: {}]
  %s2 = inlined_call_operand.vmem [shape: bf16[128,128], index: 2, kind: input, shape index: {}]
  %s3 = inlined_call_operand.vmem [shape: bf16[128,128], index: 3, kind: input, shape index: {}]
  %s4 = inlined_call_operand.vmem [shape: bf16[128,128], index: 4, kind: output, shape index: {0}]
  %s5 = inlined_call_operand.vmem [shape: f32[32,128], index: 5, kind: output, shape index: {1}]
  %s6 = inlined_call_operand.vmem [shape: bf16[128,128], index: 6, kind: output, shape index: {2}]
  %s7 = inlined_call_operand.vmem [shape: f32[32,128], index: 7, kind: output, shape index: {3}]
  %8 = xla_tuple %s4, %s5, %s6, %s7
  %s9 = sld [smem:[#allocation0]]
  $region73: #{basic_block_forward.6} parent=0
    _
  %s11 = ssub.s32 1, %s9
  %s12 = scalar_select 0, %s11, %s9
  loop: start=0, step=1, limit=6
  $region2: #{basic_block_forward.6} parent=0 // loop_pre_header
    _
  $region3: #{basic_block_forward.6} parent=0 // loop_header
    %s14 = sphi 0, %s18
    %p15 = scmp.ge.s32.totalorder %s14, 6
    %s24 = sphi 0, %s26
    %s27 = sphi 0, %s24
    %s28 = sphi 0, %s27
    %s44 = sphi 0, %s28
    %s48 = sphi 0, %s48
    %s50 = sphi 0, %s48
    %s51 = sphi 0, %s50
    %s65 = sphi 0, %s51
    %s71 = sphi 0, %s73
    %s74 = sphi 0, %s71
    %s75 = sphi 0, %s74
    %s91 = sphi 0, %s75
    %s95 = sphi 0, %s95
    %s97 = sphi 0, %s95
    %s98 = sphi 0, %s97
    %s112 = sphi 0, %s98
    %s118 = sphi 0, %s120
    %s121 = sphi 0, %s118
    %s122 = sphi 0, %s121
    %s138 = sphi 0, %s122
    %s144 = sphi 0, %s146
    %s147 = sphi 0, %s144
    %s148 = sphi 0, %s147
    %s164 = sphi 0, %s148
    %s170 = sphi 0, %s172
    %s173 = sphi 0, %s170
    %s174 = sphi 0, %s173
    %s190 = sphi 0, %s174
    %s196 = sphi 0, %s198
    %s199 = sphi 0, %s196
    %s200 = sphi 0, %s199
    %s216 = sphi 0, %s200
  $region4: #{basic_block_forward.6} parent=0 // loop_header_branch
    %17 = sbr.rel (%p15) target = $region8
  $region5: #{basic_block_forward.6} parent=0 // loop_body
    %s19 = ssub.s32 %s14, 1
    %s20 = ssub.s32 %s14, 2
    %s21 = sadd.s32 %s14, 1
    %s22 = ssub.s32 %s14, %s21
    %p23 = scmp.eq.s32.totalorder %s22, 0
    %s25 = sadd.s32 %s24, 1
    %s26 = scalar_select %p23, %s24, %s25
    %p29 = pneg %p23
    %p30 = scmp.eq.s32.totalorder %s14, 3
    %p31 = por %p29, %p30
    %p32 = scmp.ne.s32.totalorder %s24, %s27
    %p33 = scmp.eq.s32.totalorder %s14, 0
    %p34 = por %p32, %p33
    %p35 = scmp.ne.s32.totalorder %s24, %s27
    %p36 = scmp.eq.s32.totalorder %s19, 3
    %p37 = por %p35, %p36
    %p38 = scmp.ne.s32.totalorder %s27, %s28
    %p39 = scmp.eq.s32.totalorder %s19, 0
    %p40 = por %p38, %p39
    %p41 = scmp.ne.s32.totalorder %s27, %s28
    %p42 = scmp.eq.s32.totalorder %s20, 3
    %p43 = por %p41, %p42
    %p45 = scmp.ne.s32.totalorder %s28, %s44
    %p46 = scmp.eq.s32.totalorder %s20, 0
    %p47 = por %p45, %p46
    %s49 = sadd.s32 %s48, 1
    %p52 = scmp.eq.s32.totalorder %s14, 3
    %p53 = scmp.ne.s32.totalorder %s48, %s50
    %p54 = scmp.eq.s32.totalorder %s14, 0
    %p55 = por %p53, %p54
    %p56 = scmp.ne.s32.totalorder %s48, %s50
    %p57 = scmp.eq.s32.totalorder %s19, 3
    %p58 = por %p56, %p57
    %p59 = scmp.ne.s32.totalorder %s50, %s51
    %p60 = scmp.eq.s32.totalorder %s19, 0
    %p61 = por %p59, %p60
    %p62 = scmp.ne.s32.totalorder %s50, %s51
    %p63 = scmp.eq.s32.totalorder %s20, 3
    %p64 = por %p62, %p63
    %p66 = scmp.ne.s32.totalorder %s51, %s65
    %p67 = scmp.eq.s32.totalorder %s20, 0
    %p68 = por %p66, %p67
    %s69 = ssub.s32 %s14, %s21
    %p70 = scmp.eq.s32.totalorder %s69, 0
    %s72 = sadd.s32 %s71, 1
    %s73 = scalar_select %p70, %s71, %s72
    %p76 = pneg %p70
    %p77 = scmp.eq.s32.totalorder %s14, 3
    %p78 = por %p76, %p77
    %p79 = scmp.ne.s32.totalorder %s71, %s74
    %p80 = scmp.eq.s32.totalorder %s14, 0
    %p81 = por %p79, %p80
    %p82 = scmp.ne.s32.totalorder %s71, %s74
    %p83 = scmp.eq.s32.totalorder %s19, 3
    %p84 = por %p82, %p83
    %p85 = scmp.ne.s32.totalorder %s74, %s75
    %p86 = scmp.eq.s32.totalorder %s19, 0
    %p87 = por %p85, %p86
    %p88 = scmp.ne.s32.totalorder %s74, %s75
    %p89 = scmp.eq.s32.totalorder %s20, 3
    %p90 = por %p88, %p89
    %p92 = scmp.ne.s32.totalorder %s75, %s91
    %p93 = scmp.eq.s32.totalorder %s20, 0
    %p94 = por %p92, %p93
    %s96 = sadd.s32 %s95, 1
    %p99 = scmp.eq.s32.totalorder %s14, 3
    %p100 = scmp.ne.s32.totalorder %s95, %s97
    %p101 = scmp.eq.s32.totalorder %s14, 0
    %p102 = por %p100, %p101
    %p103 = scmp.ne.s32.totalorder %s95, %s97
    %p104 = scmp.eq.s32.totalorder %s19, 3
    %p105 = por %p103, %p104
    %p106 = scmp.ne.s32.totalorder %s97, %s98
    %p107 = scmp.eq.s32.totalorder %s19, 0
    %p108 = por %p106, %p107
    %p109 = scmp.ne.s32.totalorder %s97, %s98
    %p110 = scmp.eq.s32.totalorder %s20, 3
    %p111 = por %p109, %p110
    %p113 = scmp.ne.s32.totalorder %s98, %s112
    %p114 = scmp.eq.s32.totalorder %s20, 0
    %p115 = por %p113, %p114
    %s116 = ssub.s32 %s14, %s21
    %p117 = scmp.eq.s32.totalorder %s116, 0
    %s119 = sadd.s32 %s118, 1
    %s120 = scalar_select %p117, %s118, %s119
    %p123 = pneg %p117
    %p124 = scmp.eq.s32.totalorder %s14, 3
    %p125 = por %p123, %p124
    %p126 = scmp.ne.s32.totalorder %s118, %s121
    %p127 = scmp.eq.s32.totalorder %s14, 0
    %p128 = por %p126, %p127
    %p129 = scmp.ne.s32.totalorder %s118, %s121
    %p130 = scmp.eq.s32.totalorder %s19, 3
    %p131 = por %p129, %p130
    %p132 = scmp.ne.s32.totalorder %s121, %s122
    %p133 = scmp.eq.s32.totalorder %s19, 0
    %p134 = por %p132, %p133
    %p135 = scmp.ne.s32.totalorder %s121, %s122
    %p136 = scmp.eq.s32.totalorder %s20, 3
    %p137 = por %p135, %p136
    %p139 = scmp.ne.s32.totalorder %s122, %s138
    %p140 = scmp.eq.s32.totalorder %s20, 0
    %p141 = por %p139, %p140
    %s142 = ssub.s32 %s14, %s21
    %p143 = scmp.eq.s32.totalorder %s142, 0
    %s145 = sadd.s32 %s144, 1
    %s146 = scalar_select %p143, %s144, %s145
    %p149 = pneg %p143
    %p150 = scmp.eq.s32.totalorder %s14, 3
    %p151 = por %p149, %p150
    %p152 = scmp.ne.s32.totalorder %s144, %s147
    %p153 = scmp.eq.s32.totalorder %s14, 0
    %p154 = por %p152, %p153
    %p155 = scmp.ne.s32.totalorder %s144, %s147
    %p156 = scmp.eq.s32.totalorder %s19, 3
    %p157 = por %p155, %p156
    %p158 = scmp.ne.s32.totalorder %s147, %s148
    %p159 = scmp.eq.s32.totalorder %s19, 0
    %p160 = por %p158, %p159
    %p161 = scmp.ne.s32.totalorder %s147, %s148
    %p162 = scmp.eq.s32.totalorder %s20, 3
    %p163 = por %p161, %p162
    %p165 = scmp.ne.s32.totalorder %s148, %s164
    %p166 = scmp.eq.s32.totalorder %s20, 0
    %p167 = por %p165, %p166
    %s168 = ssub.s32 %s14, %s21
    %p169 = scmp.eq.s32.totalorder %s168, 0
    %s171 = sadd.s32 %s170, 1
    %s172 = scalar_select %p169, %s170, %s171
    %p175 = pneg %p169
    %p176 = scmp.eq.s32.totalorder %s14, 3
    %p177 = por %p175, %p176
    %p178 = scmp.ne.s32.totalorder %s170, %s173
    %p179 = scmp.eq.s32.totalorder %s14, 0
    %p180 = por %p178, %p179
    %p181 = scmp.ne.s32.totalorder %s170, %s173
    %p182 = scmp.eq.s32.totalorder %s19, 3
    %p183 = por %p181, %p182
    %p184 = scmp.ne.s32.totalorder %s173, %s174
    %p185 = scmp.eq.s32.totalorder %s19, 0
    %p186 = por %p184, %p185
    %p187 = scmp.ne.s32.totalorder %s173, %s174
    %p188 = scmp.eq.s32.totalorder %s20, 3
    %p189 = por %p187, %p188
    %p191 = scmp.ne.s32.totalorder %s174, %s190
    %p192 = scmp.eq.s32.totalorder %s20, 0
    %p193 = por %p191, %p192
    %s194 = ssub.s32 %s14, %s21
    %p195 = scmp.eq.s32.totalorder %s194, 0
    %s197 = sadd.s32 %s196, 1
    %s198 = scalar_select %p195, %s196, %s197
    %p201 = pneg %p195
    %p202 = scmp.eq.s32.totalorder %s14, 3
    %p203 = por %p201, %p202
    %p204 = scmp.ne.s32.totalorder %s196, %s199
    %p205 = scmp.eq.s32.totalorder %s14, 0
    %p206 = por %p204, %p205
    %p207 = scmp.ne.s32.totalorder %s196, %s199
    %p208 = scmp.eq.s32.totalorder %s19, 3
    %p209 = por %p207, %p208
    %p210 = scmp.ne.s32.totalorder %s199, %s200
    %p211 = scmp.eq.s32.totalorder %s19, 0
    %p212 = por %p210, %p211
    %p213 = scmp.ne.s32.totalorder %s199, %s200
    %p214 = scmp.eq.s32.totalorder %s20, 3
    %p215 = por %p213, %p214
    %p217 = scmp.ne.s32.totalorder %s200, %s216
    %p218 = scmp.eq.s32.totalorder %s20, 0
    %p219 = por %p217, %p218
    %p220 = scmp.le.s32.totalorder 1, %s14
    %p221 = scmp.lt.s32.totalorder %s14, 5
    %p222 = pnand %p220, %p221
    %p223 = pneg %p222
    // Predicated region
    $region9: #{basic_block_forward.6} parent=5 // pred_check
      _
    $region10: #{basic_block_forward.6} parent=5 // pred_check_branch
      %225 = sbr.rel (%p222) target = $region12
    $region11: #{basic_block_forward.6} parent=5 // pred_region
      %s226 = ssub.s32 %s14, 1
      // Predicated region
      $region13: #{basic_block_forward.6} parent=11 // pred_check
        %p227 = pneg %p61
      $region14: #{basic_block_forward.6} parent=11 // pred_check_branch
        %229 = sbr.rel (%p227) target = $region16
      $region15: #{basic_block_forward.6} parent=11 // pred_region
        _
      $region16: #{basic_block_forward.6} parent=11 // pred_fallthru
        _
      // Predicated region
      $region17: #{basic_block_forward.6} parent=11 // pred_check
        %p230 = pneg %p108
      $region18: #{basic_block_forward.6} parent=11 // pred_check_branch
        %232 = sbr.rel (%p230) target = $region20
      $region19: #{basic_block_forward.6} parent=11 // pred_region
        _
      $region20: #{basic_block_forward.6} parent=11 // pred_fallthru
        _
    $region12: #{basic_block_forward.6} parent=5 // pred_fallthru
      _
    %p233 = scmp.lt.s32.totalorder %s14, 4
    // Predicated region
    $region21: #{basic_block_forward.6} parent=5 // pred_check
      %p234 = pneg %p233
    $region22: #{basic_block_forward.6} parent=5 // pred_check_branch
      %236 = sbr.rel (%p234) target = $region24
    $region23: #{basic_block_forward.6} parent=5 // pred_region
      // Predicated region
      $region25: #{basic_block_forward.6} parent=23 // pred_check
        %p237 = pneg %p34
      $region26: #{basic_block_forward.6} parent=23 // pred_check_branch
        %239 = sbr.rel (%p237) target = $region28
      $region27: #{basic_block_forward.6} parent=23 // pred_region
        %s240 = smul.u32 4, %s14
        %p241 = scmp.lt.s32.totalorder %s240, 15
        %s242 = scalar_select %p241, %s240, 15
        %s243 = smul.addr %s242, 9
        %s244 = smul.addr %s243, 4
        %s245 = scalar_lea.vmem %s0, %s244
        %s246 = smul.u32 4, %s14
      $region28: #{basic_block_forward.6} parent=23 // pred_fallthru
        _
      // Predicated region
      $region29: #{basic_block_forward.6} parent=23 // pred_check
        %p247 = pneg %p81
      $region30: #{basic_block_forward.6} parent=23 // pred_check_branch
        %249 = sbr.rel (%p247) target = $region32
      $region31: #{basic_block_forward.6} parent=23 // pred_region
        %s250 = smul.u32 4, %s14
        %p251 = scmp.lt.s32.totalorder %s250, 15
        %s252 = scalar_select %p251, %s250, 15
        %s253 = smul.addr %s252, 4
        %s254 = scalar_lea.vmem %s2, %s253
        %s255 = smul.u32 4, %s14
      $region32: #{basic_block_forward.6} parent=23 // pred_fallthru
        _
    $region24: #{basic_block_forward.6} parent=5 // pred_fallthru
      _
    %p256 = scmp.le.s32.totalorder 1, %s14
    %p257 = scmp.lt.s32.totalorder %s14, 5
    %p258 = pnand %p256, %p257
    %p259 = pneg %p258
    // Predicated region
    $region33: #{basic_block_forward.6} parent=5 // pred_check
      _
    $region34: #{basic_block_forward.6} parent=5 // pred_check_branch
      %261 = sbr.rel (%p258) target = $region36
    $region35: #{basic_block_forward.6} parent=5 // pred_region
      %s262 = ssub.s32 %s14, 1
      %s263 = smul.u32 4, %s19
      %p264 = scmp.lt.s32.totalorder %s263, 15
      %s265 = scalar_select %p264, %s263, 15
      %s266 = smul.addr %s265, 9
      %s267 = smul.addr %s266, 4
      %s268 = scalar_lea.vmem %s0, %s267
      %p269 = pneg %p40
      %p270 = pneg %p37
      %p271 = pneg %p61
      %p272 = pneg %p58
      %s273 = smul.u32 4, %s19
      %p274 = scmp.lt.s32.totalorder %s273, 15
      %s275 = scalar_select %p274, %s273, 15
      %s276 = smul.addr %s275, 4
      %s277 = scalar_lea.vmem %s2, %s276
      %p278 = pneg %p87
      %p279 = pneg %p84
      %p280 = pneg %p108
      %p281 = pneg %p105
      %p282 = pneg %p134
      %p283 = pneg %p131
      %s284 = smul.u32 4, %s19
      %p285 = scmp.lt.s32.totalorder %s284, 15
      %s286 = scalar_select %p285, %s284, 15
      %s287 = smul.addr %s286, 4
      %s288 = scalar_lea.vmem %s4, %s287
      %p289 = pneg %p160
      %p290 = pneg %p157
      %p291 = scmp.lt.s32.totalorder %s19, 3
      %s292 = scalar_select %p291, %s19, 3
      %s293 = smul.addr %s292, 8
      %s294 = scalar_lea.vmem %s5, %s293
      %p295 = pneg %p186
      %p296 = pneg %p183
      %s297 = smul.u32 4, %s19
      %p298 = scmp.lt.s32.totalorder %s297, 15
      %s299 = scalar_select %p298, %s297, 15
      %s300 = smul.addr %s299, 4
      %s301 = scalar_lea.vmem %s6, %s300
      %p302 = pneg %p212
      %p303 = pneg %p209
      %p304 = scmp.lt.s32.totalorder %s19, 3
      %s305 = scalar_select %p304, %s19, 3
      %s306 = smul.addr %s305, 8
      %s307 = scalar_lea.vmem %s7, %s306
      %s308 = smul.u32 4, %s19
      %p309 = scmp.lt.s32.totalorder %s308, 15
      %s310 = scalar_select %p309, %s308, 15
      %s311 = smul.addr %s310, 9
      %s312 = smul.addr %s311, 4
      %s313 = scalar_lea.vmem %s0, %s312
      %s314 = smul.u32 4, %s19
      %s315 = smul.u32 4, %s19
      %p316 = scmp.lt.s32.totalorder %s315, 15
      %s317 = scalar_select %p316, %s315, 15
      %s318 = smul.addr %s317, 4
      %s319 = scalar_lea.vmem %s2, %s318
      %s320 = smul.u32 4, %s19
      %s321 = smul.u32 4, %s19
      %p322 = scmp.lt.s32.totalorder %s321, 15
      %s323 = scalar_select %p322, %s321, 15
      %s324 = smul.addr %s323, 4
      %s325 = scalar_lea.vmem %s4, %s324
      %s326 = smul.u32 4, %s19
      %p327 = scmp.lt.s32.totalorder %s19, 3
      %s328 = scalar_select %p327, %s19, 3
      %s329 = smul.addr %s328, 8
      %s330 = scalar_lea.vmem %s5, %s329
      %s331 = smul.u32 4, %s19
      %p332 = scmp.lt.s32.totalorder %s331, 15
      %s333 = scalar_select %p332, %s331, 15
      %s334 = smul.addr %s333, 4
      %s335 = scalar_lea.vmem %s6, %s334
      %s336 = smul.u32 4, %s19
      %p337 = scmp.lt.s32.totalorder %s19, 3
      %s338 = scalar_select %p337, %s19, 3
      %s339 = smul.addr %s338, 8
      %s340 = scalar_lea.vmem %s7, %s339
      %v341 = vld [vmem:[%s313] sm:$0xff]
      %v342 = vld [vmem:[%s313 + $0x8] sm:$0xff]
      %v343 = vld [vmem:[%s313 + $0x10] sm:$0xff]
      %v344 = vld [vmem:[%s313 + $0x18] sm:$0xff]
      %v345 = vld [vmem:[%s313 + $0x20] sm:$0xf]
      %v346 = vld [vmem:[%s313 + $0x24] sm:$0xff]
      %v347 = vld [vmem:[%s313 + $0x2c] sm:$0xff]
      %v348 = vld [vmem:[%s313 + $0x34] sm:$0xff]
      %v349 = vld [vmem:[%s313 + $0x3c] sm:$0xff]
      %v350 = vld [vmem:[%s313 + $0x44] sm:$0xf]
      %v351 = vld [vmem:[%s313 + $0x48] sm:$0xff]
      %v352 = vld [vmem:[%s313 + $0x50] sm:$0xff]
      %v353 = vld [vmem:[%s313 + $0x58] sm:$0xff]
      %v354 = vld [vmem:[%s313 + $0x60] sm:$0xff]
      %v355 = vld [vmem:[%s313 + $0x68] sm:$0xf]
      %v356 = vld [vmem:[%s313 + $0x6c] sm:$0xff]
      %v357 = vld [vmem:[%s313 + $0x74] sm:$0xff]
      %v358 = vld [vmem:[%s313 + $0x7c] sm:$0xff]
      %v359 = vld [vmem:[%s313 + $0x84] sm:$0xff]
      %v360 = vld [vmem:[%s313 + $0x8c] sm:$0xf]
      %v361 = vld [vmem:[%s1] sm:$0xf]
      %v362 = vld [vmem:[%s1 + $0x4] sm:$0xf]
      %v363 = vld [vmem:[%s1 + $0x8] sm:$0xf]
      %v364 = vld [vmem:[%s1 + $0xc] sm:$0xf]
      %v365 = vld [vmem:[%s1 + $0x10] sm:$0xf]
      %v366 = vld [vmem:[%s1 + $0x14] sm:$0xf]
      %v367 = vld [vmem:[%s1 + $0x18] sm:$0xf]
      %v368 = vld [vmem:[%s1 + $0x1c] sm:$0xf]
      %v369 = vld [vmem:[%s1 + $0x20] sm:$0xf]
      %v370 = vld [vmem:[%s1 + $0x24] sm:$0xf]
      %v371 = vld [vmem:[%s1 + $0x28] sm:$0xf]
      %v372 = vld [vmem:[%s1 + $0x2c] sm:$0xf]
      %v373 = vld [vmem:[%s1 + $0x30] sm:$0xf]
      %v374 = vld [vmem:[%s1 + $0x34] sm:$0xf]
      %v375 = vld [vmem:[%s1 + $0x38] sm:$0xf]
      %v376 = vld [vmem:[%s1 + $0x3c] sm:$0xf]
      %v377 = vld [vmem:[%s1 + $0x40] sm:$0xf]
      %v378 = vld [vmem:[%s1 + $0x44] sm:$0xf]
      %v379 = vld [vmem:[%s1 + $0x48] sm:$0xf]
      %v380 = vld [vmem:[%s1 + $0x4c] sm:$0xf]
      %v381 = vld [vmem:[%s1 + $0x50] sm:$0xf]
      %v382 = vld [vmem:[%s1 + $0x54] sm:$0xf]
      %v383 = vld [vmem:[%s1 + $0x58] sm:$0xf]
      %v384 = vld [vmem:[%s1 + $0x5c] sm:$0xf]
      %v385 = vld [vmem:[%s1 + $0x60] sm:$0xf]
      %v386 = vld [vmem:[%s1 + $0x64] sm:$0xf]
      %v387 = vld [vmem:[%s1 + $0x68] sm:$0xf]
      %v388 = vld [vmem:[%s1 + $0x6c] sm:$0xf]
      %v389 = vld [vmem:[%s1 + $0x70] sm:$0xf]
      %v390 = vld [vmem:[%s1 + $0x74] sm:$0xf]
      %v391 = vld [vmem:[%s1 + $0x78] sm:$0xf]
      %v392 = vld [vmem:[%s1 + $0x7c] sm:$0xf]
      %v393 = vld [vmem:[%s1 + $0x80] sm:$0xf]
      %v394 = vld [vmem:[%s1 + $0x84] sm:$0xf]
      %v395 = vld [vmem:[%s1 + $0x88] sm:$0xf]
      %v396 = vld [vmem:[%s1 + $0x8c] sm:$0xf]
      %v397 = vld [vmem:[%s1 + $0x90] sm:$0xf]
      %v398 = vld [vmem:[%s1 + $0x94] sm:$0xf]
      %v399 = vld [vmem:[%s1 + $0x98] sm:$0xf]
      %v400 = vld [vmem:[%s1 + $0x9c] sm:$0xf]
      %v401 = vld [vmem:[%s1 + $0xa0] sm:$0xf]
      %v402 = vld [vmem:[%s1 + $0xa4] sm:$0xf]
      %v403 = vld [vmem:[%s1 + $0xa8] sm:$0xf]
      %v404 = vld [vmem:[%s1 + $0xac] sm:$0xf]
      %v405 = vld [vmem:[%s1 + $0xb0] sm:$0xf]
      %v406 = vld [vmem:[%s1 + $0xb4] sm:$0xf]
      %v407 = vld [vmem:[%s1 + $0xb8] sm:$0xf]
      %v408 = vld [vmem:[%s1 + $0xbc] sm:$0xf]
      %v409 = vld [vmem:[%s1 + $0xc0] sm:$0xf]
      %v410 = vld [vmem:[%s1 + $0xc4] sm:$0xf]
      %v411 = vld [vmem:[%s1 + $0xc8] sm:$0xf]
      %v412 = vld [vmem:[%s1 + $0xcc] sm:$0xf]
      %v413 = vld [vmem:[%s1 + $0xd0] sm:$0xf]
      %v414 = vld [vmem:[%s1 + $0xd4] sm:$0xf]
      %v415 = vld [vmem:[%s1 + $0xd8] sm:$0xf]
      %v416 = vld [vmem:[%s1 + $0xdc] sm:$0xf]
      %v417 = vld [vmem:[%s1 + $0xe0] sm:$0xf]
      %v418 = vld [vmem:[%s1 + $0xe4] sm:$0xf]
      %v419 = vld [vmem:[%s1 + $0xe8] sm:$0xf]
      %v420 = vld [vmem:[%s1 + $0xec] sm:$0xf]
      %v421 = vld [vmem:[%s1 + $0xf0] sm:$0xf]
      %v422 = vld [vmem:[%s1 + $0xf4] sm:$0xf]
      %v423 = vld [vmem:[%s1 + $0xf8] sm:$0xf]
      %v424 = vld [vmem:[%s1 + $0xfc] sm:$0xf]
      %v425 = vld [vmem:[%s1 + $0x100] sm:$0xf]
      %v426 = vld [vmem:[%s1 + $0x104] sm:$0xf]
      %v427 = vld [vmem:[%s1 + $0x108] sm:$0xf]
      %v428 = vld [vmem:[%s1 + $0x10c] sm:$0xf]
      %v429 = vld [vmem:[%s1 + $0x110] sm:$0xf]
      %v430 = vld [vmem:[%s1 + $0x114] sm:$0xf]
      %v431 = vld [vmem:[%s1 + $0x118] sm:$0xf]
      %v432 = vld [vmem:[%s1 + $0x11c] sm:$0xf]
      %v433 = vld [vmem:[%s1 + $0x120] sm:$0xf]
      %v434 = vld [vmem:[%s1 + $0x124] sm:$0xf]
      %v435 = vld [vmem:[%s1 + $0x128] sm:$0xf]
      %v436 = vld [vmem:[%s1 + $0x12c] sm:$0xf]
      %v437 = vld [vmem:[%s1 + $0x130] sm:$0xf]
      %v438 = vld [vmem:[%s1 + $0x134] sm:$0xf]
      %v439 = vld [vmem:[%s1 + $0x138] sm:$0xf]
      %v440 = vld [vmem:[%s1 + $0x13c] sm:$0xf]
      %v441 = vld [vmem:[%s1 + $0x140] sm:$0xf]
      %v442 = vld [vmem:[%s1 + $0x144] sm:$0xf]
      %v443 = vld [vmem:[%s1 + $0x148] sm:$0xf]
      %v444 = vld [vmem:[%s1 + $0x14c] sm:$0xf]
      %v445 = vld [vmem:[%s1 + $0x150] sm:$0xf]
      %v446 = vld [vmem:[%s1 + $0x154] sm:$0xf]
      %v447 = vld [vmem:[%s1 + $0x158] sm:$0xf]
      %v448 = vld [vmem:[%s1 + $0x15c] sm:$0xf]
      %v449 = vld [vmem:[%s1 + $0x160] sm:$0xf]
      %v450 = vld [vmem:[%s1 + $0x164] sm:$0xf]
      %v451 = vld [vmem:[%s1 + $0x168] sm:$0xf]
      %v452 = vld [vmem:[%s1 + $0x16c] sm:$0xf]
      %v453 = vld [vmem:[%s1 + $0x170] sm:$0xf]
      %v454 = vld [vmem:[%s1 + $0x174] sm:$0xf]
      %v455 = vld [vmem:[%s1 + $0x178] sm:$0xf]
      %v456 = vld [vmem:[%s1 + $0x17c] sm:$0xf]
      %v457 = vld [vmem:[%s1 + $0x180] sm:$0xf]
      %v458 = vld [vmem:[%s1 + $0x184] sm:$0xf]
      %v459 = vld [vmem:[%s1 + $0x188] sm:$0xf]
      %v460 = vld [vmem:[%s1 + $0x18c] sm:$0xf]
      %v461 = vld [vmem:[%s1 + $0x190] sm:$0xf]
      %v462 = vld [vmem:[%s1 + $0x194] sm:$0xf]
      %v463 = vld [vmem:[%s1 + $0x198] sm:$0xf]
      %v464 = vld [vmem:[%s1 + $0x19c] sm:$0xf]
      %v465 = vld [vmem:[%s1 + $0x1a0] sm:$0xf]
      %v466 = vld [vmem:[%s1 + $0x1a4] sm:$0xf]
      %v467 = vld [vmem:[%s1 + $0x1a8] sm:$0xf]
      %v468 = vld [vmem:[%s1 + $0x1ac] sm:$0xf]
      %v469 = vld [vmem:[%s1 + $0x1b0] sm:$0xf]
      %v470 = vld [vmem:[%s1 + $0x1b4] sm:$0xf]
      %v471 = vld [vmem:[%s1 + $0x1b8] sm:$0xf]
      %v472 = vld [vmem:[%s1 + $0x1bc] sm:$0xf]
      %v473 = vld [vmem:[%s1 + $0x1c0] sm:$0xf]
      %v474 = vld [vmem:[%s1 + $0x1c4] sm:$0xf]
      %v475 = vld [vmem:[%s1 + $0x1c8] sm:$0xf]
      %v476 = vld [vmem:[%s1 + $0x1cc] sm:$0xf]
      %v477 = vld [vmem:[%s1 + $0x1d0] sm:$0xf]
      %v478 = vld [vmem:[%s1 + $0x1d4] sm:$0xf]
      %v479 = vld [vmem:[%s1 + $0x1d8] sm:$0xf]
      %v480 = vld [vmem:[%s1 + $0x1dc] sm:$0xf]
      %v481 = vld [vmem:[%s1 + $0x1e0] sm:$0xf]
      %v482 = vld [vmem:[%s1 + $0x1e4] sm:$0xf]
      %v483 = vld [vmem:[%s1 + $0x1e8] sm:$0xf]
      %v484 = vld [vmem:[%s1 + $0x1ec] sm:$0xf]
      %v485 = vld [vmem:[%s1 + $0x1f0] sm:$0xf]
      %v486 = vld [vmem:[%s1 + $0x1f4] sm:$0xf]
      %v487 = vld [vmem:[%s1 + $0x1f8] sm:$0xf]
      %v488 = vld [vmem:[%s1 + $0x1fc] sm:$0xf]
      %v489 = vld [vmem:[%s1 + $0x200] sm:$0xf]
      %v490 = vld [vmem:[%s1 + $0x204] sm:$0xf]
      %v491 = vld [vmem:[%s1 + $0x208] sm:$0xf]
      %v492 = vld [vmem:[%s1 + $0x20c] sm:$0xf]
      %v493 = vld [vmem:[%s1 + $0x210] sm:$0xf]
      %v494 = vld [vmem:[%s1 + $0x214] sm:$0xf]
      %v495 = vld [vmem:[%s1 + $0x218] sm:$0xf]
      %v496 = vld [vmem:[%s1 + $0x21c] sm:$0xf]
      %v497 = vld [vmem:[%s1 + $0x220] sm:$0xf]
      %v498 = vld [vmem:[%s1 + $0x224] sm:$0xf]
      %v499 = vld [vmem:[%s1 + $0x228] sm:$0xf]
      %v500 = vld [vmem:[%s1 + $0x22c] sm:$0xf]
      %v501 = vld [vmem:[%s1 + $0x230] sm:$0xf]
      %v502 = vld [vmem:[%s1 + $0x234] sm:$0xf]
      %v503 = vld [vmem:[%s1 + $0x238] sm:$0xf]
      %v504 = vld [vmem:[%s1 + $0x23c] sm:$0xf]
      %v525 = vunpack.c.l.b16 %v341
      %v526 = vunpack.c.h.b16 %v341
      %v527 = vunpack.c.l.b16 %v342
      %v528 = vunpack.c.h.b16 %v342
      %v529 = vunpack.c.l.b16 %v343
      %v530 = vunpack.c.h.b16 %v343
      %v531 = vunpack.c.l.b16 %v344
      %v532 = vunpack.c.h.b16 %v344
      %v533 = vunpack.c.l.b16 %v345
      %v534 = vunpack.c.l.b16 %v346
      %v535 = vunpack.c.h.b16 %v346
      %v536 = vunpack.c.l.b16 %v347
      %v537 = vunpack.c.h.b16 %v347
      %v538 = vunpack.c.l.b16 %v348
      %v539 = vunpack.c.h.b16 %v348
      %v540 = vunpack.c.l.b16 %v349
      %v541 = vunpack.c.h.b16 %v349
      %v542 = vunpack.c.l.b16 %v350
      %v543 = vunpack.c.l.b16 %v351
      %v544 = vunpack.c.h.b16 %v351
      %v545 = vunpack.c.l.b16 %v352
      %v546 = vunpack.c.h.b16 %v352
      %v547 = vunpack.c.l.b16 %v353
      %v548 = vunpack.c.h.b16 %v353
      %v549 = vunpack.c.l.b16 %v354
      %v550 = vunpack.c.h.b16 %v354
      %v551 = vunpack.c.l.b16 %v355
      %v552 = vunpack.c.l.b16 %v356
      %v553 = vunpack.c.h.b16 %v356
      %v554 = vunpack.c.l.b16 %v357
      %v555 = vunpack.c.h.b16 %v357
      %v556 = vunpack.c.l.b16 %v358
      %v557 = vunpack.c.h.b16 %v358
      %v558 = vunpack.c.l.b16 %v359
      %v559 = vunpack.c.h.b16 %v359
      %v560 = vunpack.c.l.b16 %v360
      %v561 = vpack.c.b16 %v534, %v525
      %v562 = vpack.c.b16 %v535, %v526
      %v563 = vpack.c.b16 %v536, %v527
      %v564 = vpack.c.b16 %v537, %v528
      %v565 = vpack.c.b16 %v538, %v529
      %v566 = vpack.c.b16 %v539, %v530
      %v567 = vpack.c.b16 %v540, %v531
      %v568 = vpack.c.b16 %v541, %v532
      %v569 = vpack.c.b16 %v542, %v533
      %v570 = vpack.c.b16 %v552, %v543
      %v571 = vpack.c.b16 %v553, %v544
      %v572 = vpack.c.b16 %v554, %v545
      %v573 = vpack.c.b16 %v555, %v546
      %v574 = vpack.c.b16 %v556, %v547
      %v575 = vpack.c.b16 %v557, %v548
      %v576 = vpack.c.b16 %v558, %v549
      %v577 = vpack.c.b16 %v559, %v550
      %v578 = vpack.c.b16 %v560, %v551
      %v741 = vunpack.c.l.b16 %v361
      %v742 = vunpack.c.l.b16 %v362
      %v743 = vunpack.c.l.b16 %v363
      %v744 = vunpack.c.l.b16 %v364
      %v745 = vunpack.c.l.b16 %v365
      %v746 = vunpack.c.l.b16 %v366
      %v747 = vunpack.c.l.b16 %v367
      %v748 = vunpack.c.l.b16 %v368
      %v749 = vunpack.c.l.b16 %v369
      %v750 = vunpack.c.l.b16 %v370
      %v751 = vunpack.c.l.b16 %v371
      %v752 = vunpack.c.l.b16 %v372
      %v753 = vunpack.c.l.b16 %v373
      %v754 = vunpack.c.l.b16 %v374
      %v755 = vunpack.c.l.b16 %v375
      %v756 = vunpack.c.l.b16 %v376
      %v757 = vunpack.c.l.b16 %v377
      %v758 = vunpack.c.l.b16 %v378
      %v759 = vunpack.c.l.b16 %v379
      %v760 = vunpack.c.l.b16 %v380
      %v761 = vunpack.c.l.b16 %v381
      %v762 = vunpack.c.l.b16 %v382
      %v763 = vunpack.c.l.b16 %v383
      %v764 = vunpack.c.l.b16 %v384
      %v765 = vunpack.c.l.b16 %v385
      %v766 = vunpack.c.l.b16 %v386
      %v767 = vunpack.c.l.b16 %v387
      %v768 = vunpack.c.l.b16 %v388
      %v769 = vunpack.c.l.b16 %v389
      %v770 = vunpack.c.l.b16 %v390
      %v771 = vunpack.c.l.b16 %v391
      %v772 = vunpack.c.l.b16 %v392
      %v773 = vunpack.c.l.b16 %v393
      %v774 = vunpack.c.l.b16 %v394
      %v775 = vunpack.c.l.b16 %v395
      %v776 = vunpack.c.l.b16 %v396
      %v777 = vunpack.c.l.b16 %v397
      %v778 = vunpack.c.l.b16 %v398
      %v779 = vunpack.c.l.b16 %v399
      %v780 = vunpack.c.l.b16 %v400
      %v781 = vunpack.c.l.b16 %v401
      %v782 = vunpack.c.l.b16 %v402
      %v783 = vunpack.c.l.b16 %v403
      %v784 = vunpack.c.l.b16 %v404
      %v785 = vunpack.c.l.b16 %v405
      %v786 = vunpack.c.l.b16 %v406
      %v787 = vunpack.c.l.b16 %v407
      %v788 = vunpack.c.l.b16 %v408
      %v789 = vunpack.c.l.b16 %v409
      %v790 = vunpack.c.l.b16 %v410
      %v791 = vunpack.c.l.b16 %v411
      %v792 = vunpack.c.l.b16 %v412
      %v793 = vunpack.c.l.b16 %v413
      %v794 = vunpack.c.l.b16 %v414
      %v795 = vunpack.c.l.b16 %v415
      %v796 = vunpack.c.l.b16 %v416
      %v797 = vunpack.c.l.b16 %v417
      %v798 = vunpack.c.l.b16 %v418
      %v799 = vunpack.c.l.b16 %v419
      %v800 = vunpack.c.l.b16 %v420
      %v801 = vunpack.c.l.b16 %v421
      %v802 = vunpack.c.l.b16 %v422
      %v803 = vunpack.c.l.b16 %v423
      %v804 = vunpack.c.l.b16 %v424
      %v805 = vunpack.c.l.b16 %v425
      %v806 = vunpack.c.l.b16 %v426
      %v807 = vunpack.c.l.b16 %v427
      %v808 = vunpack.c.l.b16 %v428
      %v809 = vunpack.c.l.b16 %v429
      %v810 = vunpack.c.l.b16 %v430
      %v811 = vunpack.c.l.b16 %v431
      %v812 = vunpack.c.l.b16 %v432
      %v813 = vunpack.c.l.b16 %v433
      %v814 = vunpack.c.l.b16 %v434
      %v815 = vunpack.c.l.b16 %v435
      %v816 = vunpack.c.l.b16 %v436
      %v817 = vunpack.c.l.b16 %v437
      %v818 = vunpack.c.l.b16 %v438
      %v819 = vunpack.c.l.b16 %v439
      %v820 = vunpack.c.l.b16 %v440
      %v821 = vunpack.c.l.b16 %v441
      %v822 = vunpack.c.l.b16 %v442
      %v823 = vunpack.c.l.b16 %v443
      %v824 = vunpack.c.l.b16 %v444
      %v825 = vunpack.c.l.b16 %v445
      %v826 = vunpack.c.l.b16 %v446
      %v827 = vunpack.c.l.b16 %v447
      %v828 = vunpack.c.l.b16 %v448
      %v829 = vunpack.c.l.b16 %v449
      %v830 = vunpack.c.l.b16 %v450
      %v831 = vunpack.c.l.b16 %v451
      %v832 = vunpack.c.l.b16 %v452
      %v833 = vunpack.c.l.b16 %v453
      %v834 = vunpack.c.l.b16 %v454
      %v835 = vunpack.c.l.b16 %v455
      %v836 = vunpack.c.l.b16 %v456
      %v837 = vunpack.c.l.b16 %v457
      %v838 = vunpack.c.l.b16 %v458
      %v839 = vunpack.c.l.b16 %v459
      %v840 = vunpack.c.l.b16 %v460
      %v841 = vunpack.c.l.b16 %v461
      %v842 = vunpack.c.l.b16 %v462
      %v843 = vunpack.c.l.b16 %v463
      %v844 = vunpack.c.l.b16 %v464
      %v845 = vunpack.c.l.b16 %v465
      %v846 = vunpack.c.l.b16 %v466
      %v847 = vunpack.c.l.b16 %v467
      %v848 = vunpack.c.l.b16 %v468
      %v849 = vunpack.c.l.b16 %v469
      %v850 = vunpack.c.l.b16 %v470
      %v851 = vunpack.c.l.b16 %v471
      %v852 = vunpack.c.l.b16 %v472
      %v853 = vunpack.c.l.b16 %v473
      %v854 = vunpack.c.l.b16 %v474
      %v855 = vunpack.c.l.b16 %v475
      %v856 = vunpack.c.l.b16 %v476
      %v857 = vunpack.c.l.b16 %v477
      %v858 = vunpack.c.l.b16 %v478
      %v859 = vunpack.c.l.b16 %v479
      %v860 = vunpack.c.l.b16 %v480
      %v861 = vunpack.c.l.b16 %v481
      %v862 = vunpack.c.l.b16 %v482
      %v863 = vunpack.c.l.b16 %v483
      %v864 = vunpack.c.l.b16 %v484
      %v865 = vunpack.c.l.b16 %v485
      %v866 = vunpack.c.l.b16 %v486
      %v867 = vunpack.c.l.b16 %v487
      %v868 = vunpack.c.l.b16 %v488
      %v869 = vunpack.c.l.b16 %v489
      %v870 = vunpack.c.l.b16 %v490
      %v871 = vunpack.c.l.b16 %v491
      %v872 = vunpack.c.l.b16 %v492
      %v873 = vunpack.c.l.b16 %v493
      %v874 = vunpack.c.l.b16 %v494
      %v875 = vunpack.c.l.b16 %v495
      %v876 = vunpack.c.l.b16 %v496
      %v877 = vunpack.c.l.b16 %v497
      %v878 = vunpack.c.l.b16 %v498
      %v879 = vunpack.c.l.b16 %v499
      %v880 = vunpack.c.l.b16 %v500
      %v881 = vunpack.c.l.b16 %v501
      %v882 = vunpack.c.l.b16 %v502
      %v883 = vunpack.c.l.b16 %v503
      %v884 = vunpack.c.l.b16 %v504
      %v885 = vpack.c.b16 %v742, %v741
      %v886 = vpack.c.b16 %v744, %v743
      %v887 = vpack.c.b16 %v746, %v745
      %v888 = vpack.c.b16 %v748, %v747
      %v889 = vpack.c.b16 %v750, %v749
      %v890 = vpack.c.b16 %v752, %v751
      %v891 = vpack.c.b16 %v754, %v753
      %v892 = vpack.c.b16 %v756, %v755
      %v893 = vpack.c.b16 %v758, %v757
      %v894 = vpack.c.b16 %v760, %v759
      %v895 = vpack.c.b16 %v762, %v761
      %v896 = vpack.c.b16 %v764, %v763
      %v897 = vpack.c.b16 %v766, %v765
      %v898 = vpack.c.b16 %v768, %v767
      %v899 = vpack.c.b16 %v770, %v769
      %v900 = vpack.c.b16 %v772, %v771
      %v901 = vpack.c.b16 %v774, %v773
      %v902 = vpack.c.b16 %v776, %v775
      %v903 = vpack.c.b16 %v778, %v777
      %v904 = vpack.c.b16 %v780, %v779
      %v905 = vpack.c.b16 %v782, %v781
      %v906 = vpack.c.b16 %v784, %v783
      %v907 = vpack.c.b16 %v786, %v785
      %v908 = vpack.c.b16 %v788, %v787
      %v909 = vpack.c.b16 %v790, %v789
      %v910 = vpack.c.b16 %v792, %v791
      %v911 = vpack.c.b16 %v794, %v793
      %v912 = vpack.c.b16 %v796, %v795
      %v913 = vpack.c.b16 %v798, %v797
      %v914 = vpack.c.b16 %v800, %v799
      %v915 = vpack.c.b16 %v802, %v801
      %v916 = vpack.c.b16 %v804, %v803
      %v917 = vpack.c.b16 %v806, %v805
      %v918 = vpack.c.b16 %v808, %v807
      %v919 = vpack.c.b16 %v810, %v809
      %v920 = vpack.c.b16 %v812, %v811
      %v921 = vpack.c.b16 %v814, %v813
      %v922 = vpack.c.b16 %v816, %v815
      %v923 = vpack.c.b16 %v818, %v817
      %v924 = vpack.c.b16 %v820, %v819
      %v925 = vpack.c.b16 %v822, %v821
      %v926 = vpack.c.b16 %v824, %v823
      %v927 = vpack.c.b16 %v826, %v825
      %v928 = vpack.c.b16 %v828, %v827
      %v929 = vpack.c.b16 %v830, %v829
      %v930 = vpack.c.b16 %v832, %v831
      %v931 = vpack.c.b16 %v834, %v833
      %v932 = vpack.c.b16 %v836, %v835
      %v933 = vpack.c.b16 %v838, %v837
      %v934 = vpack.c.b16 %v840, %v839
      %v935 = vpack.c.b16 %v842, %v841
      %v936 = vpack.c.b16 %v844, %v843
      %v937 = vpack.c.b16 %v846, %v845
      %v938 = vpack.c.b16 %v848, %v847
      %v939 = vpack.c.b16 %v850, %v849
      %v940 = vpack.c.b16 %v852, %v851
      %v941 = vpack.c.b16 %v854, %v853
      %v942 = vpack.c.b16 %v856, %v855
      %v943 = vpack.c.b16 %v858, %v857
      %v944 = vpack.c.b16 %v860, %v859
      %v945 = vpack.c.b16 %v862, %v861
      %v946 = vpack.c.b16 %v864, %v863
      %v947 = vpack.c.b16 %v866, %v865
      %v948 = vpack.c.b16 %v868, %v867
      %v949 = vpack.c.b16 %v870, %v869
      %v950 = vpack.c.b16 %v872, %v871
      %v951 = vpack.c.b16 %v874, %v873
      %v952 = vpack.c.b16 %v876, %v875
      %v953 = vpack.c.b16 %v878, %v877
      %v954 = vpack.c.b16 %v880, %v879
      %v955 = vpack.c.b16 %v882, %v881
      %v956 = vpack.c.b16 %v884, %v883
      %1029 = vmatpush.bf16.msra.mxu0 %v892
      %1030 = vmatpush.bf16.msra.mxu0 %v891
      %1031 = vmatpush.bf16.msra.mxu0 %v890
      %1032 = vmatpush.bf16.msra.mxu0 %v889
      %1033 = vmatpush.bf16.msra.mxu0 %v888
      %1034 = vmatpush.bf16.msra.mxu0 %v887
      %1035 = vmatpush.bf16.msra.mxu0 %v886
      %1036 = vmatpush.bf16.msra.mxu0 %v885
      %1037 = vmatmul.bf16.gmra.mxu0 %v561
      %v1038 = vpop.f32.mrf.mxu0
      %v1039 = vadd.f32 0.0, %v1038
      %v1040 = vpop.f32.mrf.mxu0
      %v1041 = vadd.f32 0.0, %v1040
      %1042 = vmatmul.bf16.gmra.mxu0 %v570
      %v1043 = vpop.f32.mrf.mxu0
      %v1044 = vadd.f32 0.0, %v1043
      %v1045 = vpop.f32.mrf.mxu0
      %v1046 = vadd.f32 0.0, %v1045
      %1047 = vdwg.mxu0
      %1048 = vmatpush.bf16.msra.mxu0 %v900
      %1049 = vmatpush.bf16.msra.mxu0 %v899
      %1050 = vmatpush.bf16.msra.mxu0 %v898
      %1051 = vmatpush.bf16.msra.mxu0 %v897
      %1052 = vmatpush.bf16.msra.mxu0 %v896
      %1053 = vmatpush.bf16.msra.mxu0 %v895
      %1054 = vmatpush.bf16.msra.mxu0 %v894
      %1055 = vmatpush.bf16.msra.mxu0 %v893
      %1056 = vmatmul.bf16.gmra.mxu0 %v562
      %v1057 = vpop.f32.mrf.mxu0
      %v1058 = vadd.f32 %v1039, %v1057
      %v1059 = vpop.f32.mrf.mxu0
      %v1060 = vadd.f32 %v1041, %v1059
      %1061 = vmatmul.bf16.gmra.mxu0 %v571
      %v1062 = vpop.f32.mrf.mxu0
      %v1063 = vadd.f32 %v1044, %v1062
      %v1064 = vpop.f32.mrf.mxu0
      %v1065 = vadd.f32 %v1046, %v1064
      %1066 = vdwg.mxu0
      %1067 = vmatpush.bf16.msra.mxu0 %v908
      %1068 = vmatpush.bf16.msra.mxu0 %v907
      %1069 = vmatpush.bf16.msra.mxu0 %v906
      %1070 = vmatpush.bf16.msra.mxu0 %v905
      %1071 = vmatpush.bf16.msra.mxu0 %v904
      %1072 = vmatpush.bf16.msra.mxu0 %v903
      %1073 = vmatpush.bf16.msra.mxu0 %v902
      %1074 = vmatpush.bf16.msra.mxu0 %v901
      %1075 = vmatmul.bf16.gmra.mxu0 %v563
      %v1076 = vpop.f32.mrf.mxu0
      %v1077 = vadd.f32 %v1058, %v1076
      %v1078 = vpop.f32.mrf.mxu0
      %v1079 = vadd.f32 %v1060, %v1078
      %1080 = vmatmul.bf16.gmra.mxu0 %v572
      %v1081 = vpop.f32.mrf.mxu0
      %v1082 = vadd.f32 %v1063, %v1081
      %v1083 = vpop.f32.mrf.mxu0
      %v1084 = vadd.f32 %v1065, %v1083
      %1085 = vdwg.mxu0
      %1086 = vmatpush.bf16.msra.mxu0 %v916
      %1087 = vmatpush.bf16.msra.mxu0 %v915
      %1088 = vmatpush.bf16.msra.mxu0 %v914
      %1089 = vmatpush.bf16.msra.mxu0 %v913
      %1090 = vmatpush.bf16.msra.mxu0 %v912
      %1091 = vmatpush.bf16.msra.mxu0 %v911
      %1092 = vmatpush.bf16.msra.mxu0 %v910
      %1093 = vmatpush.bf16.msra.mxu0 %v909
      %1094 = vmatmul.bf16.gmra.mxu0 %v564
      %v1095 = vpop.f32.mrf.mxu0
      %v1096 = vadd.f32 %v1077, %v1095
      %v1097 = vpop.f32.mrf.mxu0
      %v1098 = vadd.f32 %v1079, %v1097
      %1099 = vmatmul.bf16.gmra.mxu0 %v573
      %v1100 = vpop.f32.mrf.mxu0
      %v1101 = vadd.f32 %v1082, %v1100
      %v1102 = vpop.f32.mrf.mxu0
      %v1103 = vadd.f32 %v1084, %v1102
      %1104 = vdwg.mxu0
      %1105 = vmatpush.bf16.msra.mxu0 %v924
      %1106 = vmatpush.bf16.msra.mxu0 %v923
      %1107 = vmatpush.bf16.msra.mxu0 %v922
      %1108 = vmatpush.bf16.msra.mxu0 %v921
      %1109 = vmatpush.bf16.msra.mxu0 %v920
      %1110 = vmatpush.bf16.msra.mxu0 %v919
      %1111 = vmatpush.bf16.msra.mxu0 %v918
      %1112 = vmatpush.bf16.msra.mxu0 %v917
      %1113 = vmatmul.bf16.gmra.mxu0 %v565
      %v1114 = vpop.f32.mrf.mxu0
      %v1115 = vadd.f32 %v1096, %v1114
      %v1116 = vpop.f32.mrf.mxu0
      %v1117 = vadd.f32 %v1098, %v1116
      %1118 = vmatmul.bf16.gmra.mxu0 %v574
      %v1119 = vpop.f32.mrf.mxu0
      %v1120 = vadd.f32 %v1101, %v1119
      %v1121 = vpop.f32.mrf.mxu0
      %v1122 = vadd.f32 %v1103, %v1121
      %1123 = vdwg.mxu0
      %1124 = vmatpush.bf16.msra.mxu0 %v932
      %1125 = vmatpush.bf16.msra.mxu0 %v931
      %1126 = vmatpush.bf16.msra.mxu0 %v930
      %1127 = vmatpush.bf16.msra.mxu0 %v929
      %1128 = vmatpush.bf16.msra.mxu0 %v928
      %1129 = vmatpush.bf16.msra.mxu0 %v927
      %1130 = vmatpush.bf16.msra.mxu0 %v926
      %1131 = vmatpush.bf16.msra.mxu0 %v925
      %1132 = vmatmul.bf16.gmra.mxu0 %v566
      %v1133 = vpop.f32.mrf.mxu0
      %v1134 = vadd.f32 %v1115, %v1133
      %v1135 = vpop.f32.mrf.mxu0
      %v1136 = vadd.f32 %v1117, %v1135
      %1137 = vmatmul.bf16.gmra.mxu0 %v575
      %v1138 = vpop.f32.mrf.mxu0
      %v1139 = vadd.f32 %v1120, %v1138
      %v1140 = vpop.f32.mrf.mxu0
      %v1141 = vadd.f32 %v1122, %v1140
      %1142 = vdwg.mxu0
      %1143 = vmatpush.bf16.msra.mxu0 %v940
      %1144 = vmatpush.bf16.msra.mxu0 %v939
      %1145 = vmatpush.bf16.msra.mxu0 %v938
      %1146 = vmatpush.bf16.msra.mxu0 %v937
      %1147 = vmatpush.bf16.msra.mxu0 %v936
      %1148 = vmatpush.bf16.msra.mxu0 %v935
      %1149 = vmatpush.bf16.msra.mxu0 %v934
      %1150 = vmatpush.bf16.msra.mxu0 %v933
      %1151 = vmatmul.bf16.gmra.mxu0 %v567
      %v1152 = vpop.f32.mrf.mxu0
      %v1153 = vadd.f32 %v1134, %v1152
      %v1154 = vpop.f32.mrf.mxu0
      %v1155 = vadd.f32 %v1136, %v1154
      %1156 = vmatmul.bf16.gmra.mxu0 %v576
      %v1157 = vpop.f32.mrf.mxu0
      %v1158 = vadd.f32 %v1139, %v1157
      %v1159 = vpop.f32.mrf.mxu0
      %v1160 = vadd.f32 %v1141, %v1159
      %1161 = vdwg.mxu0
      %1162 = vmatpush.bf16.msra.mxu0 %v948
      %1163 = vmatpush.bf16.msra.mxu0 %v947
      %1164 = vmatpush.bf16.msra.mxu0 %v946
      %1165 = vmatpush.bf16.msra.mxu0 %v945
      %1166 = vmatpush.bf16.msra.mxu0 %v944
      %1167 = vmatpush.bf16.msra.mxu0 %v943
      %1168 = vmatpush.bf16.msra.mxu0 %v942
      %1169 = vmatpush.bf16.msra.mxu0 %v941
      %1170 = vmatmul.bf16.gmra.mxu0 %v568
      %v1171 = vpop.f32.mrf.mxu0
      %v1172 = vadd.f32 %v1153, %v1171
      %v1173 = vpop.f32.mrf.mxu0
      %v1174 = vadd.f32 %v1155, %v1173
      %1175 = vmatmul.bf16.gmra.mxu0 %v577
      %v1176 = vpop.f32.mrf.mxu0
      %v1177 = vadd.f32 %v1158, %v1176
      %v1178 = vpop.f32.mrf.mxu0
      %v1179 = vadd.f32 %v1160, %v1178
      %1180 = vdwg.mxu0
      %1181 = vmatpush.bf16.msra.mxu0 %v956
      %1182 = vmatpush.bf16.msra.mxu0 %v955
      %1183 = vmatpush.bf16.msra.mxu0 %v954
      %1184 = vmatpush.bf16.msra.mxu0 %v953
      %1185 = vmatpush.bf16.msra.mxu0 %v952
      %1186 = vmatpush.bf16.msra.mxu0 %v951
      %1187 = vmatpush.bf16.msra.mxu0 %v950
      %1188 = vmatpush.bf16.msra.mxu0 %v949
      %1189 = vmatmul.bf16.gmra.mxu0 %v569
      %v1190 = vpop.f32.mrf.mxu0
      %v1191 = vadd.f32 %v1172, %v1190
      %v1192 = vpop.f32.mrf.mxu0
      %v1193 = vadd.f32 %v1174, %v1192
      %1194 = vmatmul.bf16.gmra.mxu0 %v578
      %v1195 = vpop.f32.mrf.mxu0
      %v1196 = vadd.f32 %v1177, %v1195
      %v1197 = vpop.f32.mrf.mxu0
      %v1198 = vadd.f32 %v1179, %v1197
      %1199 = vdwg.mxu0
      %v1200 = vpack.c.bf16 %v1191, %v1191
      %v1201 = vpack.c.bf16 %v1193, %v1193
      %v1202 = vpack.c.bf16 %v1196, %v1196
      %v1203 = vpack.c.bf16 %v1198, %v1198
      %1204 = vst [vmem:[%s325] sm:$0xf] %v1200
      %1205 = vst [vmem:[%s325 + $0x4] sm:$0xf] %v1201
      %1206 = vst [vmem:[%s325 + $0x8] sm:$0xf] %v1202
      %1207 = vst [vmem:[%s325 + $0xc] sm:$0xf] %v1203
      %v1208 = vadd.f32 %v1191, %v1193
      %v1209 = vadd.f32 %v1208, %v1196
      %v1210 = vadd.f32 %v1209, %v1198
      %v1211 = vrot.slane %v1210, 4
      %v1212 = vadd.f32 %v1210, %v1211
      %v1213 = vrot.slane %v1212, 2
      %v1214 = vadd.f32 %v1212, %v1213
      %v1215 = vrot.slane %v1214, 1
      %v1216 = vadd.f32 %v1214, %v1215
      %v1217 = vmul.f32 %v1191, %v1191
      %v1218 = vmul.f32 %v1193, %v1193
      %v1219 = vmul.f32 %v1196, %v1196
      %v1220 = vmul.f32 %v1198, %v1198
      %v1221 = vadd.f32 %v1217, %v1218
      %v1222 = vadd.f32 %v1221, %v1219
      %v1223 = vadd.f32 %v1222, %v1220
      %v1224 = vrot.slane %v1223, 4
      %v1225 = vadd.f32 %v1223, %v1224
      %v1226 = vrot.slane %v1225, 2
      %v1227 = vadd.f32 %v1225, %v1226
      %v1228 = vrot.slane %v1227, 1
      %v1229 = vadd.f32 %v1227, %v1228
      %vm1230 = vcmask 1040384
      %v1231 = vsel %vm1230, %v1216, %v1229
      %vm1232 = vcmask 1041408
      %v1233 = vsel %vm1232, %v1231, 0.0
      %1234 = vst [vmem:[%s330] sm:$0xff] %v1233
      %v1235 = vld [vmem:[%s319] sm:$0xf]
      %v1236 = vld [vmem:[%s319 + $0x4] sm:$0xf]
      %v1237 = vld [vmem:[%s319 + $0x8] sm:$0xf]
      %v1238 = vld [vmem:[%s319 + $0xc] sm:$0xf]
      %v1239 = vld [vmem:[%s3] sm:$0xf]
      %v1240 = vld [vmem:[%s3 + $0x4] sm:$0xf]
      %v1241 = vld [vmem:[%s3 + $0x8] sm:$0xf]
      %v1242 = vld [vmem:[%s3 + $0xc] sm:$0xf]
      %v1243 = vld [vmem:[%s3 + $0x10] sm:$0xf]
      %v1244 = vld [vmem:[%s3 + $0x14] sm:$0xf]
      %v1245 = vld [vmem:[%s3 + $0x18] sm:$0xf]
      %v1246 = vld [vmem:[%s3 + $0x1c] sm:$0xf]
      %v1247 = vld [vmem:[%s3 + $0x20] sm:$0xf]
      %v1248 = vld [vmem:[%s3 + $0x24] sm:$0xf]
      %v1249 = vld [vmem:[%s3 + $0x28] sm:$0xf]
      %v1250 = vld [vmem:[%s3 + $0x2c] sm:$0xf]
      %v1251 = vld [vmem:[%s3 + $0x30] sm:$0xf]
      %v1252 = vld [vmem:[%s3 + $0x34] sm:$0xf]
      %v1253 = vld [vmem:[%s3 + $0x38] sm:$0xf]
      %v1254 = vld [vmem:[%s3 + $0x3c] sm:$0xf]
      %v1259 = vunpack.c.l.b16 %v1235
      %v1260 = vunpack.c.l.b16 %v1236
      %v1261 = vunpack.c.l.b16 %v1237
      %v1262 = vunpack.c.l.b16 %v1238
      %v1263 = vpack.c.b16 %v1260, %v1259
      %v1264 = vpack.c.b16 %v1262, %v1261
      %v1283 = vunpack.c.l.b16 %v1239
      %v1284 = vunpack.c.l.b16 %v1240
      %v1285 = vunpack.c.l.b16 %v1241
      %v1286 = vunpack.c.l.b16 %v1242
      %v1287 = vunpack.c.l.b16 %v1243
      %v1288 = vunpack.c.l.b16 %v1244
      %v1289 = vunpack.c.l.b16 %v1245
      %v1290 = vunpack.c.l.b16 %v1246
      %v1291 = vunpack.c.l.b16 %v1247
      %v1292 = vunpack.c.l.b16 %v1248
      %v1293 = vunpack.c.l.b16 %v1249
      %v1294 = vunpack.c.l.b16 %v1250
      %v1295 = vunpack.c.l.b16 %v1251
      %v1296 = vunpack.c.l.b16 %v1252
      %v1297 = vunpack.c.l.b16 %v1253
      %v1298 = vunpack.c.l.b16 %v1254
      %v1299 = vpack.c.b16 %v1284, %v1283
      %v1300 = vpack.c.b16 %v1286, %v1285
      %v1301 = vpack.c.b16 %v1288, %v1287
      %v1302 = vpack.c.b16 %v1290, %v1289
      %v1303 = vpack.c.b16 %v1292, %v1291
      %v1304 = vpack.c.b16 %v1294, %v1293
      %v1305 = vpack.c.b16 %v1296, %v1295
      %v1306 = vpack.c.b16 %v1298, %v1297
      %1315 = vmatpush.bf16.msra.mxu0 %v1306
      %1316 = vmatpush.bf16.msra.mxu0 %v1305
      %1317 = vmatpush.bf16.msra.mxu0 %v1304
      %1318 = vmatpush.bf16.msra.mxu0 %v1303
      %1319 = vmatpush.bf16.msra.mxu0 %v1302
      %1320 = vmatpush.bf16.msra.mxu0 %v1301
      %1321 = vmatpush.bf16.msra.mxu0 %v1300
      %1322 = vmatpush.bf16.msra.mxu0 %v1299
      %1323 = vmatmul.bf16.gmra.mxu0 %v1263
      %v1324 = vpop.f32.mrf.mxu0
      %v1325 = vadd.f32 0.0, %v1324
      %v1326 = vpop.f32.mrf.mxu0
      %v1327 = vadd.f32 0.0, %v1326
      %1328 = vmatmul.bf16.gmra.mxu0 %v1264
      %v1329 = vpop.f32.mrf.mxu0
      %v1330 = vadd.f32 0.0, %v1329
      %v1331 = vpop.f32.mrf.mxu0
      %v1332 = vadd.f32 0.0, %v1331
      %1333 = vdwg.mxu0
      %v1334 = vpack.c.bf16 %v1325, %v1325
      %v1335 = vpack.c.bf16 %v1327, %v1327
      %v1336 = vpack.c.bf16 %v1330, %v1330
      %v1337 = vpack.c.bf16 %v1332, %v1332
      %1338 = vst [vmem:[%s335] sm:$0xf] %v1334
      %1339 = vst [vmem:[%s335 + $0x4] sm:$0xf] %v1335
      %1340 = vst [vmem:[%s335 + $0x8] sm:$0xf] %v1336
      %1341 = vst [vmem:[%s335 + $0xc] sm:$0xf] %v1337
      %v1342 = vadd.f32 %v1325, %v1327
      %v1343 = vadd.f32 %v1342, %v1330
      %v1344 = vadd.f32 %v1343, %v1332
      %v1345 = vrot.slane %v1344, 4
      %v1346 = vadd.f32 %v1344, %v1345
      %v1347 = vrot.slane %v1346, 2
      %v1348 = vadd.f32 %v1346, %v1347
      %v1349 = vrot.slane %v1348, 1
      %v1350 = vadd.f32 %v1348, %v1349
      %v1351 = vmul.f32 %v1325, %v1325
      %v1352 = vmul.f32 %v1327, %v1327
      %v1353 = vmul.f32 %v1330, %v1330
      %v1354 = vmul.f32 %v1332, %v1332
      %v1355 = vadd.f32 %v1351, %v1352
      %v1356 = vadd.f32 %v1355, %v1353
      %v1357 = vadd.f32 %v1356, %v1354
      %v1358 = vrot.slane %v1357, 4
      %v1359 = vadd.f32 %v1357, %v1358
      %v1360 = vrot.slane %v1359, 2
      %v1361 = vadd.f32 %v1359, %v1360
      %v1362 = vrot.slane %v1361, 1
      %v1363 = vadd.f32 %v1361, %v1362
      %v1364 = vsel %vm1230, %v1350, %v1363
      %v1365 = vsel %vm1232, %v1364, 0.0
      %1366 = vst [vmem:[%s340] sm:$0xff] %v1365
      %s1367 = smul.u32 4, %s19
      %p1368 = scmp.lt.s32.totalorder %s1367, 15
      %s1369 = scalar_select %p1368, %s1367, 15
      %s1370 = smul.addr %s1369, 4
      %s1371 = scalar_lea.vmem %s4, %s1370
      %p1372 = scmp.lt.s32.totalorder %s19, 3
      %s1373 = scalar_select %p1372, %s19, 3
      %s1374 = smul.addr %s1373, 8
      %s1375 = scalar_lea.vmem %s5, %s1374
      %s1376 = smul.u32 4, %s19
      %p1377 = scmp.lt.s32.totalorder %s1376, 15
      %s1378 = scalar_select %p1377, %s1376, 15
      %s1379 = smul.addr %s1378, 4
      %s1380 = scalar_lea.vmem %s6, %s1379
      %p1381 = scmp.lt.s32.totalorder %s19, 3
      %s1382 = scalar_select %p1381, %s19, 3
      %s1383 = smul.addr %s1382, 8
      %s1384 = scalar_lea.vmem %s7, %s1383
      // Predicated region
      $region37: #{basic_block_forward.6} parent=35 // pred_check
        %p1385 = pneg %p131
      $region38: #{basic_block_forward.6} parent=35 // pred_check_branch
        %1387 = sbr.rel (%p1385) target = $region40
      $region39: #{basic_block_forward.6} parent=35 // pred_region
        %s1388 = smul.u32 4, %s19
      $region40: #{basic_block_forward.6} parent=35 // pred_fallthru
        _
      // Predicated region
      $region41: #{basic_block_forward.6} parent=35 // pred_check
        %p1389 = pneg %p157
      $region42: #{basic_block_forward.6} parent=35 // pred_check_branch
        %1391 = sbr.rel (%p1389) target = $region44
      $region43: #{basic_block_forward.6} parent=35 // pred_region
        _
      $region44: #{basic_block_forward.6} parent=35 // pred_fallthru
        _
      // Predicated region
      $region45: #{basic_block_forward.6} parent=35 // pred_check
        %p1392 = pneg %p183
      $region46: #{basic_block_forward.6} parent=35 // pred_check_branch
        %1394 = sbr.rel (%p1392) target = $region48
      $region47: #{basic_block_forward.6} parent=35 // pred_region
        %s1395 = smul.u32 4, %s19
      $region48: #{basic_block_forward.6} parent=35 // pred_fallthru
        _
      // Predicated region
      $region49: #{basic_block_forward.6} parent=35 // pred_check
        %p1396 = pneg %p209
      $region50: #{basic_block_forward.6} parent=35 // pred_check_branch
        %1398 = sbr.rel (%p1396) target = $region52
      $region51: #{basic_block_forward.6} parent=35 // pred_region
        _
      $region52: #{basic_block_forward.6} parent=35 // pred_fallthru
        _
    $region36: #{basic_block_forward.6} parent=5 // pred_fallthru
      _
    %p1399 = scmp.le.s32.totalorder 2, %s14
    // Predicated region
    $region53: #{basic_block_forward.6} parent=5 // pred_check
      %p1400 = pneg %p1399
    $region54: #{basic_block_forward.6} parent=5 // pred_check_branch
      %1402 = sbr.rel (%p1400) target = $region56
    $region55: #{basic_block_forward.6} parent=5 // pred_region
      %s1403 = ssub.s32 %s14, 2
      // Predicated region
      $region57: #{basic_block_forward.6} parent=55 // pred_check
        %p1404 = pneg %p137
      $region58: #{basic_block_forward.6} parent=55 // pred_check_branch
        %1406 = sbr.rel (%p1404) target = $region60
      $region59: #{basic_block_forward.6} parent=55 // pred_region
        %s1407 = smul.u32 4, %s20
        %p1408 = scmp.lt.s32.totalorder %s1407, 15
        %s1409 = scalar_select %p1408, %s1407, 15
        %s1410 = smul.addr %s1409, 4
        %s1411 = scalar_lea.vmem %s4, %s1410
      $region60: #{basic_block_forward.6} parent=55 // pred_fallthru
        _
      // Predicated region
      $region61: #{basic_block_forward.6} parent=55 // pred_check
        %p1412 = pneg %p163
      $region62: #{basic_block_forward.6} parent=55 // pred_check_branch
        %1414 = sbr.rel (%p1412) target = $region64
      $region63: #{basic_block_forward.6} parent=55 // pred_region
        %p1415 = scmp.lt.s32.totalorder %s20, 3
        %s1416 = scalar_select %p1415, %s20, 3
        %s1417 = smul.addr %s1416, 8
        %s1418 = scalar_lea.vmem %s5, %s1417
      $region64: #{basic_block_forward.6} parent=55 // pred_fallthru
        _
      // Predicated region
      $region65: #{basic_block_forward.6} parent=55 // pred_check
        %p1419 = pneg %p189
      $region66: #{basic_block_forward.6} parent=55 // pred_check_branch
        %1421 = sbr.rel (%p1419) target = $region68
      $region67: #{basic_block_forward.6} parent=55 // pred_region
        %s1422 = smul.u32 4, %s20
        %p1423 = scmp.lt.s32.totalorder %s1422, 15
        %s1424 = scalar_select %p1423, %s1422, 15
        %s1425 = smul.addr %s1424, 4
        %s1426 = scalar_lea.vmem %s6, %s1425
      $region68: #{basic_block_forward.6} parent=55 // pred_fallthru
        _
      // Predicated region
      $region69: #{basic_block_forward.6} parent=55 // pred_check
        %p1427 = pneg %p215
      $region70: #{basic_block_forward.6} parent=55 // pred_check_branch
        %1429 = sbr.rel (%p1427) target = $region72
      $region71: #{basic_block_forward.6} parent=55 // pred_region
        %p1430 = scmp.lt.s32.totalorder %s20, 3
        %s1431 = scalar_select %p1430, %s20, 3
        %s1432 = smul.addr %s1431, 8
        %s1433 = scalar_lea.vmem %s7, %s1432
      $region72: #{basic_block_forward.6} parent=55 // pred_fallthru
        _
    $region56: #{basic_block_forward.6} parent=5 // pred_fallthru
      _
  $region6: #{basic_block_forward.6} parent=0 // loop_footer
    %s18 = sadd.s32 1, %s14
  $region7: #{basic_block_forward.6} parent=0 // loop_footer_branch
    %13 = sbr.rel target = $region3
  $region8: #{basic_block_forward.6} parent=0 // loop_exit
    _

</llo_original>
